<compile_context>
chip_gen: v7x
topology: tpu7x:2x2x1
jax: 0.10.0
libtpu: 0.0.40
codegen_flags: <defaults>
</compile_context>

<pallas_src>
import functools
import math

import numpy as np
import jax
import jax.numpy as jnp
from jax.experimental import pallas as pl
from jax.experimental.pallas import tpu as pltpu


# ----------------------------------------------------------------------------
# helpers from the reference PyTorch code
# ----------------------------------------------------------------------------
def _make_divisible(v, divisor, min_value=None):
    if min_value is None:
        min_value = divisor
    new_v = max(min_value, int(v + divisor / 2) // divisor * divisor)
    if new_v < 0.9 * v:
        new_v += divisor
    return new_v


# ----------------------------------------------------------------------------
# fused bottleneck kernel (one grid step == one batch element)
# ----------------------------------------------------------------------------
def _ghost_bottleneck_kernel(*refs, H, W, K, mid_chs, out_chs,
                             init1, init2, has_se, has_shortcut):
    HW = H * W
    o_ref = refs[-1]
    x_ref, mask_ref = refs[0], refs[1]
    i = 2
    w1_ref, b1_ref, wd1_ref, bd1_ref = refs[i:i + 4]; i += 4
    if has_se:
        wr_ref, br_ref, we_ref, be_ref = refs[i:i + 4]; i += 4
    w2_ref, b2_ref, wd2_ref, bd2_ref = refs[i:i + 4]; i += 4
    if has_shortcut:
        wsd_ref, bsd_ref, wsp_ref, bsp_ref = refs[i:i + 4]; i += 4

    masks = mask_ref[...]                          # (K*K, HW) 0/1 border masks

    def pw_conv(w_ref, t, b_ref, relu):
        # 1x1 conv + folded BN: (Cout, Cin) @ (Cin, HW) + (Cout, 1)
        y = jnp.dot(w_ref[...], t, preferred_element_type=jnp.float32) + b_ref[...]
        return jnp.maximum(y, 0.0) if relu else y

    def dw_conv(wd_ref, t, b_ref, relu):
        # KxK depthwise conv (stride 1, 'same' pad) + folded BN on (C, HW).
        # Each tap is a lane roll of the flattened spatial axis; border lanes
        # (which would wrap across image rows / edges) are zeroed by `masks`.
        wd = wd_ref[...]                           # (C, K*K)
        acc = jnp.zeros_like(t)
        r = K // 2
        for kh in range(K):
            for kw in range(K):
                s = (kh - r) * W + (kw - r)        # flattened spatial shift
                shifted = t if s == 0 else pltpu.roll(t, (-s) % HW, 1)
                k = kh * K + kw
                acc = acc + shifted * masks[k:k + 1, :] * wd[:, k:k + 1]
        y = acc + b_ref[...]
        return jnp.maximum(y, 0.0) if relu else y

    x = x_ref[0]                                   # (in_chs, HW) f32

    # ---- ghost1 (ReLU) -------------------------------------------------------
    x1 = pw_conv(w1_ref, x, b1_ref, relu=True)     # (init1, HW)
    x2 = dw_conv(wd1_ref, x1, bd1_ref, relu=True)  # cheap op
    x2 = x2[:mid_chs - init1]                      # fused concat(...)[: mid_chs]

    # ---- SqueezeExcite -------------------------------------------------------
    if has_se:
        m1 = jnp.mean(x1, axis=1, keepdims=True)   # (init1, 1) spatial avg pool
        m2 = jnp.mean(x2, axis=1, keepdims=True)
        wr = wr_ref[...]                           # (reduced, mid_chs)
        red = (jnp.dot(wr[:, :init1], m1, preferred_element_type=jnp.float32) +
               jnp.dot(wr[:, init1:], m2, preferred_element_type=jnp.float32) +
               br_ref[...])
        red = jnp.maximum(red, 0.0)                # ReLU
        exp = jnp.dot(we_ref[...], red, preferred_element_type=jnp.float32) + be_ref[...]
        gate = jnp.clip(exp + 3.0, 0.0, 6.0) * (1.0 / 6.0)   # hard_sigmoid (mid,1)
        x1 = x1 * gate[:init1]
        x2 = x2 * gate[init1:]

    # ---- ghost2 (no ReLU) ----------------------------------------------------
    w2 = w2_ref[...]                               # (init2, mid_chs)
    y1 = (jnp.dot(w2[:, :init1], x1, preferred_element_type=jnp.float32) +
          jnp.dot(w2[:, init1:], x2, preferred_element_type=jnp.float32) +
          b2_ref[...])                             # (init2, HW)
    y2 = dw_conv(wd2_ref, y1, bd2_ref, relu=False)
    y2 = y2[:out_chs - init2]

    # ---- shortcut ------------------------------------------------------------
    if has_shortcut:
        sc = dw_conv(wsd_ref, x, bsd_ref, relu=False)              # (in_chs, HW)
        sc = jnp.dot(wsp_ref[...], sc, preferred_element_type=jnp.float32) + bsp_ref[...]
    else:
        sc = x                                                     # identity (in==out)

    # ---- fused concat + [:out_chs] + residual add, stored lane-dense ----------
    o_ref[0, 0:init2, :] = (y1 + sc[0:init2]).astype(o_ref.dtype)
    o_ref[0, init2:out_chs, :] = (y2 + sc[init2:out_chs]).astype(o_ref.dtype)


# ----------------------------------------------------------------------------
# wrapper: BN folding, tap masks, single pallas_call
# ----------------------------------------------------------------------------
def _dw_tap_masks(H, W, K):
    r = K // 2
    hh, ww = np.meshgrid(np.arange(H), np.arange(W), indexing="ij")
    rows = []
    for kh in range(K):
        for kw in range(K):
            dh, dw = kh - r, kw - r
            valid = ((hh + dh >= 0) & (hh + dh < H) &
                     (ww + dw >= 0) & (ww + dw < W))
            rows.append(valid.reshape(-1))
    return jnp.asarray(np.stack(rows), dtype=jnp.float32)          # (K*K, H*W)


def _fold_pw(w, scale, shift):
    # inference BN folded into a 1x1 conv: y = (scale*W) @ x + shift
    return w * scale[:, None], shift[:, None]


def _fold_dw(w, scale, shift):
    C, K, _ = w.shape
    return (w * scale[:, None, None]).reshape(C, K * K), shift[:, None]


def ghost_bottleneck_forward(x_nchw, params, stride, has_se):
    if stride > 1:
        # TODO(synk): stride>1 downsample path not implemented (demo uses stride=1).
        raise NotImplementedError("stride > 1 not supported in this synthetic kernel")

    N, in_chs, H, W = x_nchw.shape
    HW = H * W
    g1, g2 = params["ghost1"], params["ghost2"]
    mid_chs, out_chs = g1["oup"], g2["oup"]
    init1, init2 = g1["w_pw"].shape[0], g2["w_pw"].shape[0]
    K = g1["w_dw"].shape[-1]
    has_shortcut = params["shortcut"] is not None

    w1, b1 = _fold_pw(g1["w_pw"], g1["bn1_scale"], g1["bn1_shift"])
    wd1, bd1 = _fold_dw(g1["w_dw"], g1["bn2_scale"], g1["bn2_shift"])
    w2, b2 = _fold_pw(g2["w_pw"], g2["bn1_scale"], g2["bn1_shift"])
    wd2, bd2 = _fold_dw(g2["w_dw"], g2["bn2_scale"], g2["bn2_shift"])

    args = [x_nchw.reshape(N, in_chs, HW), _dw_tap_masks(H, W, K),
            w1, b1, wd1, bd1]
    if has_se:
        args += [params["se_wr"], params["se_br"][:, None],
                 params["se_we"], params["se_be"][:, None]]
    args += [w2, b2, wd2, bd2]
    if has_shortcut:
        sc = params["shortcut"]
        wsd, bsd = _fold_dw(sc["w_dw"], sc["bn1_scale"], sc["bn1_shift"])
        wsp, bsp = _fold_pw(sc["w_pw"], sc["bn2_scale"], sc["bn2_shift"])
        args += [wsd, bsd, wsp, bsp]

    in_specs = [pl.BlockSpec((1, in_chs, HW), lambda n: (n, 0, 0))]
    in_specs += [pl.BlockSpec(a.shape, lambda n: (0, 0)) for a in args[1:]]

    kernel = functools.partial(
        _ghost_bottleneck_kernel, H=H, W=W, K=K,
        mid_chs=mid_chs, out_chs=out_chs, init1=init1, init2=init2,
        has_se=has_se, has_shortcut=has_shortcut)

    out = pl.pallas_call(
        kernel,
        out_shape=jax.ShapeDtypeStruct((N, out_chs, HW), x_nchw.dtype),
        grid=(N,),
        in_specs=in_specs,
        out_specs=pl.BlockSpec((1, out_chs, HW), lambda n: (n, 0, 0)),
        compiler_params=pltpu.CompilerParams(
            dimension_semantics=("parallel",)),
    )(*args)
    return out.reshape(N, out_chs, H, W)


# ----------------------------------------------------------------------------
# deterministic parameter initialization (inference-mode BN)
# ----------------------------------------------------------------------------
def make_bn_params(key, C, eps=1e-5):
    k1, k2, k3, k4 = jax.random.split(key, 4)
    gamma = jax.random.uniform(k1, (C,), jnp.float32, 0.5, 1.5)
    beta = jax.random.normal(k2, (C,), jnp.float32) * 0.1
    mean = jax.random.normal(k3, (C,), jnp.float32) * 0.1
    var = jax.random.uniform(k4, (C,), jnp.float32, 0.5, 1.5)
    scale = gamma / jnp.sqrt(var + eps)
    shift = beta - mean * scale
    return scale, shift


def init_ghost_module(key, inp, oup, ratio=2, dw_size=3):
    # NOTE: ratio=2 (channel c of the cheap op reads channel c of the primary conv).
    init_ch = math.ceil(oup / ratio)
    new_ch = init_ch * (ratio - 1)
    k1, k2, k3, k4 = jax.random.split(key, 4)
    w_pw = jax.random.normal(k1, (init_ch, inp), jnp.float32) * 0.1
    w_dw = jax.random.normal(k2, (new_ch, dw_size, dw_size), jnp.float32) * 0.1
    bn1_s, bn1_b = make_bn_params(k3, init_ch)
    bn2_s, bn2_b = make_bn_params(k4, new_ch)
    return dict(w_pw=w_pw, w_dw=w_dw,
                bn1_scale=bn1_s, bn1_shift=bn1_b,
                bn2_scale=bn2_s, bn2_shift=bn2_b,
                oup=oup)


def init_params(key, in_chs, mid_chs, out_chs, se_ratio, stride=1):
    k1, k2, k3, k4 = jax.random.split(key, 4)
    params = dict(
        ghost1=init_ghost_module(k1, in_chs, mid_chs),
        ghost2=init_ghost_module(k2, mid_chs, out_chs),
    )
    if se_ratio is not None and se_ratio > 0.0:
        reduced = _make_divisible(mid_chs * se_ratio, 4)
        ka, kb, kc, kd = jax.random.split(k3, 4)
        params["se_wr"] = jax.random.normal(ka, (reduced, mid_chs), jnp.float32) * 0.1
        params["se_br"] = jax.random.normal(kb, (reduced,), jnp.float32) * 0.1
        params["se_we"] = jax.random.normal(kc, (mid_chs, reduced), jnp.float32) * 0.1
        params["se_be"] = jax.random.normal(kd, (mid_chs,), jnp.float32) * 0.1
    if in_chs == out_chs and stride == 1:
        params["shortcut"] = None
    else:
        ka, kb, kc, kd = jax.random.split(k4, 4)
        sc = dict(
            w_dw=jax.random.normal(ka, (in_chs, 3, 3), jnp.float32) * 0.1,
            w_pw=jax.random.normal(kc, (out_chs, in_chs), jnp.float32) * 0.1,
        )
        sc["bn1_scale"], sc["bn1_shift"] = make_bn_params(kb, in_chs)
        sc["bn2_scale"], sc["bn2_shift"] = make_bn_params(kd, out_chs)
        params["shortcut"] = sc
    return params


# ----------------------------------------------------------------------------
# main
# ----------------------------------------------------------------------------
if __name__ == "__main__":
    in_chs, mid_chs, out_chs = 16, 32, 16
    stride, se_ratio = 1, 0.25
    N, H, W = 2, 16, 16

    key = jax.random.PRNGKey(0)
    kx, kp = jax.random.split(key)
    x_nchw = jax.random.normal(kx, (N, in_chs, H, W), jnp.float32)   # PyTorch NCHW
    params = init_params(kp, in_chs, mid_chs, out_chs, se_ratio, stride)

    out = ghost_bottleneck_forward(
        x_nchw, params, stride=stride,
        has_se=(se_ratio is not None and se_ratio > 0.0))
    out = jax.block_until_ready(out)
    assert out.shape == (N, out_chs, H, W), out.shape
    assert bool(jnp.all(jnp.isfinite(out)))
    print("KERNEL_OK")
</pallas_src>

<mosaic_0001>
module attributes {stable_mosaic.version = 11 : i64} {
  func.func @_ghost_bottleneck_kernel(%arg0: i32, %arg1: memref<1x16x256xf32, #tpu.memory_space<vmem>>, %arg2: memref<9x256xf32, #tpu.memory_space<vmem>>, %arg3: memref<16x16xf32, #tpu.memory_space<vmem>>, %arg4: memref<16x1xf32, #tpu.memory_space<vmem>>, %arg5: memref<16x9xf32, #tpu.memory_space<vmem>>, %arg6: memref<16x1xf32, #tpu.memory_space<vmem>>, %arg7: memref<8x32xf32, #tpu.memory_space<vmem>>, %arg8: memref<8x1xf32, #tpu.memory_space<vmem>>, %arg9: memref<32x8xf32, #tpu.memory_space<vmem>>, %arg10: memref<32x1xf32, #tpu.memory_space<vmem>>, %arg11: memref<8x32xf32, #tpu.memory_space<vmem>>, %arg12: memref<8x1xf32, #tpu.memory_space<vmem>>, %arg13: memref<8x9xf32, #tpu.memory_space<vmem>>, %arg14: memref<8x1xf32, #tpu.memory_space<vmem>>, %arg15: memref<1x16x256xf32, #tpu.memory_space<vmem>>) attributes {dimension_semantics = [#tpu.dimension_semantics<parallel>], iteration_bounds = array<i64: 2>, scalar_prefetch = 0 : i64, scratch_operands = 0 : i64, tpu.core_type = #tpu.core_type<tc>, window_params = [{transform_indices = @transform_0, window_bounds = array<i64: 1, 16, 256>}, {pipeline_mode = #tpu.pipeline_mode<synchronous>, transform_indices = @transform_1, window_bounds = array<i64: 9, 256>}, {pipeline_mode = #tpu.pipeline_mode<synchronous>, transform_indices = @transform_2, window_bounds = array<i64: 16, 16>}, {pipeline_mode = #tpu.pipeline_mode<synchronous>, transform_indices = @transform_3, window_bounds = array<i64: 16, 1>}, {pipeline_mode = #tpu.pipeline_mode<synchronous>, transform_indices = @transform_4, window_bounds = array<i64: 16, 9>}, {pipeline_mode = #tpu.pipeline_mode<synchronous>, transform_indices = @transform_5, window_bounds = array<i64: 16, 1>}, {pipeline_mode = #tpu.pipeline_mode<synchronous>, transform_indices = @transform_6, window_bounds = array<i64: 8, 32>}, {pipeline_mode = #tpu.pipeline_mode<synchronous>, transform_indices = @transform_7, window_bounds = array<i64: 8, 1>}, {pipeline_mode = #tpu.pipeline_mode<synchronous>, transform_indices = @transform_8, window_bounds = array<i64: 32, 8>}, {pipeline_mode = #tpu.pipeline_mode<synchronous>, transform_indices = @transform_9, window_bounds = array<i64: 32, 1>}, {pipeline_mode = #tpu.pipeline_mode<synchronous>, transform_indices = @transform_10, window_bounds = array<i64: 8, 32>}, {pipeline_mode = #tpu.pipeline_mode<synchronous>, transform_indices = @transform_11, window_bounds = array<i64: 8, 1>}, {pipeline_mode = #tpu.pipeline_mode<synchronous>, transform_indices = @transform_12, window_bounds = array<i64: 8, 9>}, {pipeline_mode = #tpu.pipeline_mode<synchronous>, transform_indices = @transform_13, window_bounds = array<i64: 8, 1>}, {transform_indices = @transform_14, window_bounds = array<i64: 1, 16, 256>}]} {
    %c0 = arith.constant 0 : index
    %c0_0 = arith.constant 0 : index
    %0 = vector.load %arg2[%c0, %c0_0] : memref<9x256xf32, #tpu.memory_space<vmem>>, vector<9x256xf32>
    %c0_1 = arith.constant 0 : index
    %c0_2 = arith.constant 0 : index
    %c0_3 = arith.constant 0 : index
    %1 = vector.load %arg1[%c0_1, %c0_2, %c0_3] : memref<1x16x256xf32, #tpu.memory_space<vmem>>, vector<1x16x256xf32>
    %2 = vector.shape_cast %1 : vector<1x16x256xf32> to vector<16x256xf32>
    %c0_4 = arith.constant 0 : index
    %c0_5 = arith.constant 0 : index
    %3 = vector.load %arg3[%c0_4, %c0_5] : memref<16x16xf32, #tpu.memory_space<vmem>>, vector<16x16xf32>
    %cst = arith.constant dense<0.000000e+00> : vector<16x256xf32>
    %4 = tpu.matmul %3, %2, %cst {dimension_numbers = #tpu.dot_dimension_numbers<[1], [0], [0], [1], [0, 0, 1, 1], [], []>} : vector<16x16xf32>, vector<16x256xf32>, vector<16x256xf32> -> vector<16x256xf32>
    %c0_6 = arith.constant 0 : index
    %c0_7 = arith.constant 0 : index
    %5 = vector.load %arg4[%c0_6, %c0_7] : memref<16x1xf32, #tpu.memory_space<vmem>>, vector<16x1xf32>
    %6 = vector.broadcast %5 : vector<16x1xf32> to vector<16x256xf32>
    %7 = arith.addf %4, %6 : vector<16x256xf32>
    %cst_8 = arith.constant 0.000000e+00 : f32
    %8 = vector.broadcast %cst_8 : f32 to vector<16x256xf32>
    %9 = arith.maximumf %7, %8 : vector<16x256xf32>
    %c0_9 = arith.constant 0 : index
    %c0_10 = arith.constant 0 : index
    %10 = vector.load %arg5[%c0_9, %c0_10] : memref<16x9xf32, #tpu.memory_space<vmem>>, vector<16x9xf32>
    %cst_11 = arith.constant 0.000000e+00 : f32
    %11 = vector.broadcast %cst_11 : f32 to vector<16x256xf32>
    %c17_i32 = arith.constant 17 : i32
    %12 = tpu.dynamic_rotate %9 by %c17_i32 dim 1 : vector<16x256xf32>, i32 -> vector<16x256xf32>
    %13 = vector.extract_strided_slice %0 {offsets = [0, 0], sizes = [1, 256], strides = [1, 1]} : vector<9x256xf32> to vector<1x256xf32>
    %14 = vector.broadcast %13 : vector<1x256xf32> to vector<16x256xf32>
    %15 = arith.mulf %12, %14 : vector<16x256xf32>
    %16 = vector.extract_strided_slice %10 {offsets = [0, 0], sizes = [16, 1], strides = [1, 1]} : vector<16x9xf32> to vector<16x1xf32>
    %17 = vector.broadcast %16 : vector<16x1xf32> to vector<16x256xf32>
    %18 = arith.mulf %15, %17 : vector<16x256xf32>
    %19 = arith.addf %11, %18 : vector<16x256xf32>
    %c16_i32 = arith.constant 16 : i32
    %20 = tpu.dynamic_rotate %9 by %c16_i32 dim 1 : vector<16x256xf32>, i32 -> vector<16x256xf32>
    %21 = vector.extract_strided_slice %0 {offsets = [1, 0], sizes = [1, 256], strides = [1, 1]} : vector<9x256xf32> to vector<1x256xf32>
    %22 = vector.broadcast %21 : vector<1x256xf32> to vector<16x256xf32>
    %23 = arith.mulf %20, %22 : vector<16x256xf32>
    %24 = vector.extract_strided_slice %10 {offsets = [0, 1], sizes = [16, 1], strides = [1, 1]} : vector<16x9xf32> to vector<16x1xf32>
    %25 = vector.broadcast %24 : vector<16x1xf32> to vector<16x256xf32>
    %26 = arith.mulf %23, %25 : vector<16x256xf32>
    %27 = arith.addf %19, %26 : vector<16x256xf32>
    %c15_i32 = arith.constant 15 : i32
    %28 = tpu.dynamic_rotate %9 by %c15_i32 dim 1 : vector<16x256xf32>, i32 -> vector<16x256xf32>
    %29 = vector.extract_strided_slice %0 {offsets = [2, 0], sizes = [1, 256], strides = [1, 1]} : vector<9x256xf32> to vector<1x256xf32>
    %30 = vector.broadcast %29 : vector<1x256xf32> to vector<16x256xf32>
    %31 = arith.mulf %28, %30 : vector<16x256xf32>
    %32 = vector.extract_strided_slice %10 {offsets = [0, 2], sizes = [16, 1], strides = [1, 1]} : vector<16x9xf32> to vector<16x1xf32>
    %33 = vector.broadcast %32 : vector<16x1xf32> to vector<16x256xf32>
    %34 = arith.mulf %31, %33 : vector<16x256xf32>
    %35 = arith.addf %27, %34 : vector<16x256xf32>
    %c1_i32 = arith.constant 1 : i32
    %36 = tpu.dynamic_rotate %9 by %c1_i32 dim 1 : vector<16x256xf32>, i32 -> vector<16x256xf32>
    %37 = vector.extract_strided_slice %0 {offsets = [3, 0], sizes = [1, 256], strides = [1, 1]} : vector<9x256xf32> to vector<1x256xf32>
    %38 = vector.broadcast %37 : vector<1x256xf32> to vector<16x256xf32>
    %39 = arith.mulf %36, %38 : vector<16x256xf32>
    %40 = vector.extract_strided_slice %10 {offsets = [0, 3], sizes = [16, 1], strides = [1, 1]} : vector<16x9xf32> to vector<16x1xf32>
    %41 = vector.broadcast %40 : vector<16x1xf32> to vector<16x256xf32>
    %42 = arith.mulf %39, %41 : vector<16x256xf32>
    %43 = arith.addf %35, %42 : vector<16x256xf32>
    %44 = vector.extract_strided_slice %0 {offsets = [4, 0], sizes = [1, 256], strides = [1, 1]} : vector<9x256xf32> to vector<1x256xf32>
    %45 = vector.broadcast %44 : vector<1x256xf32> to vector<16x256xf32>
    %46 = arith.mulf %9, %45 : vector<16x256xf32>
    %47 = vector.extract_strided_slice %10 {offsets = [0, 4], sizes = [16, 1], strides = [1, 1]} : vector<16x9xf32> to vector<16x1xf32>
    %48 = vector.broadcast %47 : vector<16x1xf32> to vector<16x256xf32>
    %49 = arith.mulf %46, %48 : vector<16x256xf32>
    %50 = arith.addf %43, %49 : vector<16x256xf32>
    %c255_i32 = arith.constant 255 : i32
    %51 = tpu.dynamic_rotate %9 by %c255_i32 dim 1 : vector<16x256xf32>, i32 -> vector<16x256xf32>
    %52 = vector.extract_strided_slice %0 {offsets = [5, 0], sizes = [1, 256], strides = [1, 1]} : vector<9x256xf32> to vector<1x256xf32>
    %53 = vector.broadcast %52 : vector<1x256xf32> to vector<16x256xf32>
    %54 = arith.mulf %51, %53 : vector<16x256xf32>
    %55 = vector.extract_strided_slice %10 {offsets = [0, 5], sizes = [16, 1], strides = [1, 1]} : vector<16x9xf32> to vector<16x1xf32>
    %56 = vector.broadcast %55 : vector<16x1xf32> to vector<16x256xf32>
    %57 = arith.mulf %54, %56 : vector<16x256xf32>
    %58 = arith.addf %50, %57 : vector<16x256xf32>
    %c241_i32 = arith.constant 241 : i32
    %59 = tpu.dynamic_rotate %9 by %c241_i32 dim 1 : vector<16x256xf32>, i32 -> vector<16x256xf32>
    %60 = vector.extract_strided_slice %0 {offsets = [6, 0], sizes = [1, 256], strides = [1, 1]} : vector<9x256xf32> to vector<1x256xf32>
    %61 = vector.broadcast %60 : vector<1x256xf32> to vector<16x256xf32>
    %62 = arith.mulf %59, %61 : vector<16x256xf32>
    %63 = vector.extract_strided_slice %10 {offsets = [0, 6], sizes = [16, 1], strides = [1, 1]} : vector<16x9xf32> to vector<16x1xf32>
    %64 = vector.broadcast %63 : vector<16x1xf32> to vector<16x256xf32>
    %65 = arith.mulf %62, %64 : vector<16x256xf32>
    %66 = arith.addf %58, %65 : vector<16x256xf32>
    %c240_i32 = arith.constant 240 : i32
    %67 = tpu.dynamic_rotate %9 by %c240_i32 dim 1 : vector<16x256xf32>, i32 -> vector<16x256xf32>
    %68 = vector.extract_strided_slice %0 {offsets = [7, 0], sizes = [1, 256], strides = [1, 1]} : vector<9x256xf32> to vector<1x256xf32>
    %69 = vector.broadcast %68 : vector<1x256xf32> to vector<16x256xf32>
    %70 = arith.mulf %67, %69 : vector<16x256xf32>
    %71 = vector.extract_strided_slice %10 {offsets = [0, 7], sizes = [16, 1], strides = [1, 1]} : vector<16x9xf32> to vector<16x1xf32>
    %72 = vector.broadcast %71 : vector<16x1xf32> to vector<16x256xf32>
    %73 = arith.mulf %70, %72 : vector<16x256xf32>
    %74 = arith.addf %66, %73 : vector<16x256xf32>
    %c239_i32 = arith.constant 239 : i32
    %75 = tpu.dynamic_rotate %9 by %c239_i32 dim 1 : vector<16x256xf32>, i32 -> vector<16x256xf32>
    %76 = vector.extract_strided_slice %0 {offsets = [8, 0], sizes = [1, 256], strides = [1, 1]} : vector<9x256xf32> to vector<1x256xf32>
    %77 = vector.broadcast %76 : vector<1x256xf32> to vector<16x256xf32>
    %78 = arith.mulf %75, %77 : vector<16x256xf32>
    %79 = vector.extract_strided_slice %10 {offsets = [0, 8], sizes = [16, 1], strides = [1, 1]} : vector<16x9xf32> to vector<16x1xf32>
    %80 = vector.broadcast %79 : vector<16x1xf32> to vector<16x256xf32>
    %81 = arith.mulf %78, %80 : vector<16x256xf32>
    %82 = arith.addf %74, %81 : vector<16x256xf32>
    %c0_12 = arith.constant 0 : index
    %c0_13 = arith.constant 0 : index
    %83 = vector.load %arg6[%c0_12, %c0_13] : memref<16x1xf32, #tpu.memory_space<vmem>>, vector<16x1xf32>
    %84 = vector.broadcast %83 : vector<16x1xf32> to vector<16x256xf32>
    %85 = arith.addf %82, %84 : vector<16x256xf32>
    %cst_14 = arith.constant 0.000000e+00 : f32
    %86 = vector.broadcast %cst_14 : f32 to vector<16x256xf32>
    %87 = arith.maximumf %85, %86 : vector<16x256xf32>
    %cst_15 = arith.constant dense<0.000000e+00> : vector<16xf32>
    %88 = vector.multi_reduction <add>, %9, %cst_15 [1] : vector<16x256xf32> to vector<16xf32>
    %89 = vector.shape_cast %88 : vector<16xf32> to vector<16x1xf32>
    %cst_16 = arith.constant 2.560000e+02 : f32
    %90 = vector.broadcast %cst_16 : f32 to vector<16x1xf32>
    %91 = arith.divf %89, %90 : vector<16x1xf32>
    %cst_17 = arith.constant dense<0.000000e+00> : vector<16xf32>
    %92 = vector.multi_reduction <add>, %87, %cst_17 [1] : vector<16x256xf32> to vector<16xf32>
    %93 = vector.shape_cast %92 : vector<16xf32> to vector<16x1xf32>
    %cst_18 = arith.constant 2.560000e+02 : f32
    %94 = vector.broadcast %cst_18 : f32 to vector<16x1xf32>
    %95 = arith.divf %93, %94 : vector<16x1xf32>
    %c0_19 = arith.constant 0 : index
    %c0_20 = arith.constant 0 : index
    %96 = vector.load %arg7[%c0_19, %c0_20] : memref<8x32xf32, #tpu.memory_space<vmem>>, vector<8x32xf32>
    %97 = vector.extract_strided_slice %96 {offsets = [0, 0], sizes = [8, 16], strides = [1, 1]} : vector<8x32xf32> to vector<8x16xf32>
    %cst_21 = arith.constant dense<0.000000e+00> : vector<8x1xf32>
    %98 = tpu.matmul %97, %91, %cst_21 {dimension_numbers = #tpu.dot_dimension_numbers<[1], [0], [0], [1], [0, 0, 1, 1], [], []>} : vector<8x16xf32>, vector<16x1xf32>, vector<8x1xf32> -> vector<8x1xf32>
    %99 = vector.extract_strided_slice %96 {offsets = [0, 16], sizes = [8, 16], strides = [1, 1]} : vector<8x32xf32> to vector<8x16xf32>
    %cst_22 = arith.constant dense<0.000000e+00> : vector<8x1xf32>
    %100 = tpu.matmul %99, %95, %cst_22 {dimension_numbers = #tpu.dot_dimension_numbers<[1], [0], [0], [1], [0, 0, 1, 1], [], []>} : vector<8x16xf32>, vector<16x1xf32>, vector<8x1xf32> -> vector<8x1xf32>
    %101 = arith.addf %98, %100 : vector<8x1xf32>
    %c0_23 = arith.constant 0 : index
    %c0_24 = arith.constant 0 : index
    %102 = vector.load %arg8[%c0_23, %c0_24] : memref<8x1xf32, #tpu.memory_space<vmem>>, vector<8x1xf32>
    %103 = arith.addf %101, %102 : vector<8x1xf32>
    %cst_25 = arith.constant 0.000000e+00 : f32
    %104 = vector.broadcast %cst_25 : f32 to vector<8x1xf32>
    %105 = arith.maximumf %103, %104 : vector<8x1xf32>
    %c0_26 = arith.constant 0 : index
    %c0_27 = arith.constant 0 : index
    %106 = vector.load %arg9[%c0_26, %c0_27] : memref<32x8xf32, #tpu.memory_space<vmem>>, vector<32x8xf32>
    %cst_28 = arith.constant dense<0.000000e+00> : vector<32x1xf32>
    %107 = tpu.matmul %106, %105, %cst_28 {dimension_numbers = #tpu.dot_dimension_numbers<[1], [0], [0], [1], [0, 0, 1, 1], [], []>} : vector<32x8xf32>, vector<8x1xf32>, vector<32x1xf32> -> vector<32x1xf32>
    %c0_29 = arith.constant 0 : index
    %c0_30 = arith.constant 0 : index
    %108 = vector.load %arg10[%c0_29, %c0_30] : memref<32x1xf32, #tpu.memory_space<vmem>>, vector<32x1xf32>
    %109 = arith.addf %107, %108 : vector<32x1xf32>
    %cst_31 = arith.constant 3.000000e+00 : f32
    %110 = vector.broadcast %cst_31 : f32 to vector<32x1xf32>
    %111 = arith.addf %109, %110 : vector<32x1xf32>
    %cst_32 = arith.constant 0.000000e+00 : f32
    %cst_33 = arith.constant 6.000000e+00 : f32
    %112 = vector.broadcast %cst_32 : f32 to vector<32x1xf32>
    %113 = arith.maximumf %112, %111 : vector<32x1xf32>
    %114 = vector.broadcast %cst_33 : f32 to vector<32x1xf32>
    %115 = arith.minimumf %114, %113 : vector<32x1xf32>
    %cst_34 = arith.constant 0.166666672 : f32
    %116 = vector.broadcast %cst_34 : f32 to vector<32x1xf32>
    %117 = arith.mulf %115, %116 : vector<32x1xf32>
    %118 = vector.extract_strided_slice %117 {offsets = [0, 0], sizes = [16, 1], strides = [1, 1]} : vector<32x1xf32> to vector<16x1xf32>
    %119 = vector.broadcast %118 : vector<16x1xf32> to vector<16x256xf32>
    %120 = arith.mulf %9, %119 : vector<16x256xf32>
    %121 = vector.extract_strided_slice %117 {offsets = [16, 0], sizes = [16, 1], strides = [1, 1]} : vector<32x1xf32> to vector<16x1xf32>
    %122 = vector.broadcast %121 : vector<16x1xf32> to vector<16x256xf32>
    %123 = arith.mulf %87, %122 : vector<16x256xf32>
    %c0_35 = arith.constant 0 : index
    %c0_36 = arith.constant 0 : index
    %124 = vector.load %arg11[%c0_35, %c0_36] : memref<8x32xf32, #tpu.memory_space<vmem>>, vector<8x32xf32>
    %125 = vector.extract_strided_slice %124 {offsets = [0, 0], sizes = [8, 16], strides = [1, 1]} : vector<8x32xf32> to vector<8x16xf32>
    %cst_37 = arith.constant dense<0.000000e+00> : vector<8x256xf32>
    %126 = tpu.matmul %125, %120, %cst_37 {dimension_numbers = #tpu.dot_dimension_numbers<[1], [0], [0], [1], [0, 0, 1, 1], [], []>} : vector<8x16xf32>, vector<16x256xf32>, vector<8x256xf32> -> vector<8x256xf32>
    %127 = vector.extract_strided_slice %124 {offsets = [0, 16], sizes = [8, 16], strides = [1, 1]} : vector<8x32xf32> to vector<8x16xf32>
    %cst_38 = arith.constant dense<0.000000e+00> : vector<8x256xf32>
    %128 = tpu.matmul %127, %123, %cst_38 {dimension_numbers = #tpu.dot_dimension_numbers<[1], [0], [0], [1], [0, 0, 1, 1], [], []>} : vector<8x16xf32>, vector<16x256xf32>, vector<8x256xf32> -> vector<8x256xf32>
    %129 = arith.addf %126, %128 : vector<8x256xf32>
    %c0_39 = arith.constant 0 : index
    %c0_40 = arith.constant 0 : index
    %130 = vector.load %arg12[%c0_39, %c0_40] : memref<8x1xf32, #tpu.memory_space<vmem>>, vector<8x1xf32>
    %131 = vector.broadcast %130 : vector<8x1xf32> to vector<8x256xf32>
    %132 = arith.addf %129, %131 : vector<8x256xf32>
    %c0_41 = arith.constant 0 : index
    %c0_42 = arith.constant 0 : index
    %133 = vector.load %arg13[%c0_41, %c0_42] : memref<8x9xf32, #tpu.memory_space<vmem>>, vector<8x9xf32>
    %cst_43 = arith.constant 0.000000e+00 : f32
    %134 = vector.broadcast %cst_43 : f32 to vector<8x256xf32>
    %c17_i32_44 = arith.constant 17 : i32
    %135 = tpu.dynamic_rotate %132 by %c17_i32_44 dim 1 : vector<8x256xf32>, i32 -> vector<8x256xf32>
    %136 = vector.extract_strided_slice %0 {offsets = [0, 0], sizes = [1, 256], strides = [1, 1]} : vector<9x256xf32> to vector<1x256xf32>
    %137 = vector.broadcast %136 : vector<1x256xf32> to vector<8x256xf32>
    %138 = arith.mulf %135, %137 : vector<8x256xf32>
    %139 = vector.extract_strided_slice %133 {offsets = [0, 0], sizes = [8, 1], strides = [1, 1]} : vector<8x9xf32> to vector<8x1xf32>
    %140 = vector.broadcast %139 : vector<8x1xf32> to vector<8x256xf32>
    %141 = arith.mulf %138, %140 : vector<8x256xf32>
    %142 = arith.addf %134, %141 : vector<8x256xf32>
    %c16_i32_45 = arith.constant 16 : i32
    %143 = tpu.dynamic_rotate %132 by %c16_i32_45 dim 1 : vector<8x256xf32>, i32 -> vector<8x256xf32>
    %144 = vector.extract_strided_slice %0 {offsets = [1, 0], sizes = [1, 256], strides = [1, 1]} : vector<9x256xf32> to vector<1x256xf32>
    %145 = vector.broadcast %144 : vector<1x256xf32> to vector<8x256xf32>
    %146 = arith.mulf %143, %145 : vector<8x256xf32>
    %147 = vector.extract_strided_slice %133 {offsets = [0, 1], sizes = [8, 1], strides = [1, 1]} : vector<8x9xf32> to vector<8x1xf32>
    %148 = vector.broadcast %147 : vector<8x1xf32> to vector<8x256xf32>
    %149 = arith.mulf %146, %148 : vector<8x256xf32>
    %150 = arith.addf %142, %149 : vector<8x256xf32>
    %c15_i32_46 = arith.constant 15 : i32
    %151 = tpu.dynamic_rotate %132 by %c15_i32_46 dim 1 : vector<8x256xf32>, i32 -> vector<8x256xf32>
    %152 = vector.extract_strided_slice %0 {offsets = [2, 0], sizes = [1, 256], strides = [1, 1]} : vector<9x256xf32> to vector<1x256xf32>
    %153 = vector.broadcast %152 : vector<1x256xf32> to vector<8x256xf32>
    %154 = arith.mulf %151, %153 : vector<8x256xf32>
    %155 = vector.extract_strided_slice %133 {offsets = [0, 2], sizes = [8, 1], strides = [1, 1]} : vector<8x9xf32> to vector<8x1xf32>
    %156 = vector.broadcast %155 : vector<8x1xf32> to vector<8x256xf32>
    %157 = arith.mulf %154, %156 : vector<8x256xf32>
    %158 = arith.addf %150, %157 : vector<8x256xf32>
    %c1_i32_47 = arith.constant 1 : i32
    %159 = tpu.dynamic_rotate %132 by %c1_i32_47 dim 1 : vector<8x256xf32>, i32 -> vector<8x256xf32>
    %160 = vector.extract_strided_slice %0 {offsets = [3, 0], sizes = [1, 256], strides = [1, 1]} : vector<9x256xf32> to vector<1x256xf32>
    %161 = vector.broadcast %160 : vector<1x256xf32> to vector<8x256xf32>
    %162 = arith.mulf %159, %161 : vector<8x256xf32>
    %163 = vector.extract_strided_slice %133 {offsets = [0, 3], sizes = [8, 1], strides = [1, 1]} : vector<8x9xf32> to vector<8x1xf32>
    %164 = vector.broadcast %163 : vector<8x1xf32> to vector<8x256xf32>
    %165 = arith.mulf %162, %164 : vector<8x256xf32>
    %166 = arith.addf %158, %165 : vector<8x256xf32>
    %167 = vector.extract_strided_slice %0 {offsets = [4, 0], sizes = [1, 256], strides = [1, 1]} : vector<9x256xf32> to vector<1x256xf32>
    %168 = vector.broadcast %167 : vector<1x256xf32> to vector<8x256xf32>
    %169 = arith.mulf %132, %168 : vector<8x256xf32>
    %170 = vector.extract_strided_slice %133 {offsets = [0, 4], sizes = [8, 1], strides = [1, 1]} : vector<8x9xf32> to vector<8x1xf32>
    %171 = vector.broadcast %170 : vector<8x1xf32> to vector<8x256xf32>
    %172 = arith.mulf %169, %171 : vector<8x256xf32>
    %173 = arith.addf %166, %172 : vector<8x256xf32>
    %c255_i32_48 = arith.constant 255 : i32
    %174 = tpu.dynamic_rotate %132 by %c255_i32_48 dim 1 : vector<8x256xf32>, i32 -> vector<8x256xf32>
    %175 = vector.extract_strided_slice %0 {offsets = [5, 0], sizes = [1, 256], strides = [1, 1]} : vector<9x256xf32> to vector<1x256xf32>
    %176 = vector.broadcast %175 : vector<1x256xf32> to vector<8x256xf32>
    %177 = arith.mulf %174, %176 : vector<8x256xf32>
    %178 = vector.extract_strided_slice %133 {offsets = [0, 5], sizes = [8, 1], strides = [1, 1]} : vector<8x9xf32> to vector<8x1xf32>
    %179 = vector.broadcast %178 : vector<8x1xf32> to vector<8x256xf32>
    %180 = arith.mulf %177, %179 : vector<8x256xf32>
    %181 = arith.addf %173, %180 : vector<8x256xf32>
    %c241_i32_49 = arith.constant 241 : i32
    %182 = tpu.dynamic_rotate %132 by %c241_i32_49 dim 1 : vector<8x256xf32>, i32 -> vector<8x256xf32>
    %183 = vector.extract_strided_slice %0 {offsets = [6, 0], sizes = [1, 256], strides = [1, 1]} : vector<9x256xf32> to vector<1x256xf32>
    %184 = vector.broadcast %183 : vector<1x256xf32> to vector<8x256xf32>
    %185 = arith.mulf %182, %184 : vector<8x256xf32>
    %186 = vector.extract_strided_slice %133 {offsets = [0, 6], sizes = [8, 1], strides = [1, 1]} : vector<8x9xf32> to vector<8x1xf32>
    %187 = vector.broadcast %186 : vector<8x1xf32> to vector<8x256xf32>
    %188 = arith.mulf %185, %187 : vector<8x256xf32>
    %189 = arith.addf %181, %188 : vector<8x256xf32>
    %c240_i32_50 = arith.constant 240 : i32
    %190 = tpu.dynamic_rotate %132 by %c240_i32_50 dim 1 : vector<8x256xf32>, i32 -> vector<8x256xf32>
    %191 = vector.extract_strided_slice %0 {offsets = [7, 0], sizes = [1, 256], strides = [1, 1]} : vector<9x256xf32> to vector<1x256xf32>
    %192 = vector.broadcast %191 : vector<1x256xf32> to vector<8x256xf32>
    %193 = arith.mulf %190, %192 : vector<8x256xf32>
    %194 = vector.extract_strided_slice %133 {offsets = [0, 7], sizes = [8, 1], strides = [1, 1]} : vector<8x9xf32> to vector<8x1xf32>
    %195 = vector.broadcast %194 : vector<8x1xf32> to vector<8x256xf32>
    %196 = arith.mulf %193, %195 : vector<8x256xf32>
    %197 = arith.addf %189, %196 : vector<8x256xf32>
    %c239_i32_51 = arith.constant 239 : i32
    %198 = tpu.dynamic_rotate %132 by %c239_i32_51 dim 1 : vector<8x256xf32>, i32 -> vector<8x256xf32>
    %199 = vector.extract_strided_slice %0 {offsets = [8, 0], sizes = [1, 256], strides = [1, 1]} : vector<9x256xf32> to vector<1x256xf32>
    %200 = vector.broadcast %199 : vector<1x256xf32> to vector<8x256xf32>
    %201 = arith.mulf %198, %200 : vector<8x256xf32>
    %202 = vector.extract_strided_slice %133 {offsets = [0, 8], sizes = [8, 1], strides = [1, 1]} : vector<8x9xf32> to vector<8x1xf32>
    %203 = vector.broadcast %202 : vector<8x1xf32> to vector<8x256xf32>
    %204 = arith.mulf %201, %203 : vector<8x256xf32>
    %205 = arith.addf %197, %204 : vector<8x256xf32>
    %c0_52 = arith.constant 0 : index
    %c0_53 = arith.constant 0 : index
    %206 = vector.load %arg14[%c0_52, %c0_53] : memref<8x1xf32, #tpu.memory_space<vmem>>, vector<8x1xf32>
    %207 = vector.broadcast %206 : vector<8x1xf32> to vector<8x256xf32>
    %208 = arith.addf %205, %207 : vector<8x256xf32>
    %209 = vector.extract_strided_slice %2 {offsets = [0, 0], sizes = [8, 256], strides = [1, 1]} : vector<16x256xf32> to vector<8x256xf32>
    %210 = arith.addf %132, %209 : vector<8x256xf32>
    %c0_54 = arith.constant 0 : index
    %c0_55 = arith.constant 0 : index
    %c0_56 = arith.constant 0 : index
    %211 = vector.load %arg15[%c0_54, %c0_55, %c0_56] : memref<1x16x256xf32, #tpu.memory_space<vmem>>, vector<1x8x256xf32>
    %212 = vector.shape_cast %211 : vector<1x8x256xf32> to vector<8x256xf32>
    %213 = vector.shape_cast %210 : vector<8x256xf32> to vector<1x8x256xf32>
    tpu.vector_store %arg15[%c0_54, %c0_55, %c0_56], %213 {strides = array<i32>} : memref<1x16x256xf32, #tpu.memory_space<vmem>>, vector<1x8x256xf32>,
    %214 = vector.extract_strided_slice %2 {offsets = [8, 0], sizes = [8, 256], strides = [1, 1]} : vector<16x256xf32> to vector<8x256xf32>
    %215 = arith.addf %208, %214 : vector<8x256xf32>
    %c0_57 = arith.constant 0 : index
    %c8 = arith.constant 8 : index
    %c0_58 = arith.constant 0 : index
    %216 = vector.load %arg15[%c0_57, %c8, %c0_58] : memref<1x16x256xf32, #tpu.memory_space<vmem>>, vector<1x8x256xf32>
    %217 = vector.shape_cast %216 : vector<1x8x256xf32> to vector<8x256xf32>
    %218 = vector.shape_cast %215 : vector<8x256xf32> to vector<1x8x256xf32>
    tpu.vector_store %arg15[%c0_57, %c8, %c0_58], %218 {strides = array<i32>} : memref<1x16x256xf32, #tpu.memory_space<vmem>>, vector<1x8x256xf32>,
    return
  }
  func.func @transform_0(%arg0: i32) -> (i32, i32, i32) {
    %c0_i32 = arith.constant 0 : i32
    %c0_i32_0 = arith.constant 0 : i32
    %c0_i32_1 = arith.constant 0 : i32
    return %arg0, %c0_i32, %c0_i32_0 : i32, i32, i32
  }
  func.func @transform_1(%arg0: i32) -> (i32, i32) {
    %c0_i32 = arith.constant 0 : i32
    %c0_i32_0 = arith.constant 0 : i32
    %c0_i32_1 = arith.constant 0 : i32
    return %c0_i32, %c0_i32_0 : i32, i32
  }
  func.func @transform_2(%arg0: i32) -> (i32, i32) {
    %c0_i32 = arith.constant 0 : i32
    %c0_i32_0 = arith.constant 0 : i32
    %c0_i32_1 = arith.constant 0 : i32
    return %c0_i32, %c0_i32_0 : i32, i32
  }
  func.func @transform_3(%arg0: i32) -> (i32, i32) {
    %c0_i32 = arith.constant 0 : i32
    %c0_i32_0 = arith.constant 0 : i32
    %c0_i32_1 = arith.constant 0 : i32
    return %c0_i32, %c0_i32_0 : i32, i32
  }
  func.func @transform_4(%arg0: i32) -> (i32, i32) {
    %c0_i32 = arith.constant 0 : i32
    %c0_i32_0 = arith.constant 0 : i32
    %c0_i32_1 = arith.constant 0 : i32
    return %c0_i32, %c0_i32_0 : i32, i32
  }
  func.func @transform_5(%arg0: i32) -> (i32, i32) {
    %c0_i32 = arith.constant 0 : i32
    %c0_i32_0 = arith.constant 0 : i32
    %c0_i32_1 = arith.constant 0 : i32
    return %c0_i32, %c0_i32_0 : i32, i32
  }
  func.func @transform_6(%arg0: i32) -> (i32, i32) {
    %c0_i32 = arith.constant 0 : i32
    %c0_i32_0 = arith.constant 0 : i32
    %c0_i32_1 = arith.constant 0 : i32
    return %c0_i32, %c0_i32_0 : i32, i32
  }
  func.func @transform_7(%arg0: i32) -> (i32, i32) {
    %c0_i32 = arith.constant 0 : i32
    %c0_i32_0 = arith.constant 0 : i32
    %c0_i32_1 = arith.constant 0 : i32
    return %c0_i32, %c0_i32_0 : i32, i32
  }
  func.func @transform_8(%arg0: i32) -> (i32, i32) {
    %c0_i32 = arith.constant 0 : i32
    %c0_i32_0 = arith.constant 0 : i32
    %c0_i32_1 = arith.constant 0 : i32
    return %c0_i32, %c0_i32_0 : i32, i32
  }
  func.func @transform_9(%arg0: i32) -> (i32, i32) {
    %c0_i32 = arith.constant 0 : i32
    %c0_i32_0 = arith.constant 0 : i32
    %c0_i32_1 = arith.constant 0 : i32
    return %c0_i32, %c0_i32_0 : i32, i32
  }
  func.func @transform_10(%arg0: i32) -> (i32, i32) {
    %c0_i32 = arith.constant 0 : i32
    %c0_i32_0 = arith.constant 0 : i32
    %c0_i32_1 = arith.constant 0 : i32
    return %c0_i32, %c0_i32_0 : i32, i32
  }
  func.func @transform_11(%arg0: i32) -> (i32, i32) {
    %c0_i32 = arith.constant 0 : i32
    %c0_i32_0 = arith.constant 0 : i32
    %c0_i32_1 = arith.constant 0 : i32
    return %c0_i32, %c0_i32_0 : i32, i32
  }
  func.func @transform_12(%arg0: i32) -> (i32, i32) {
    %c0_i32 = arith.constant 0 : i32
    %c0_i32_0 = arith.constant 0 : i32
    %c0_i32_1 = arith.constant 0 : i32
    return %c0_i32, %c0_i32_0 : i32, i32
  }
  func.func @transform_13(%arg0: i32) -> (i32, i32) {
    %c0_i32 = arith.constant 0 : i32
    %c0_i32_0 = arith.constant 0 : i32
    %c0_i32_1 = arith.constant 0 : i32
    return %c0_i32, %c0_i32_0 : i32, i32
  }
  func.func @transform_14(%arg0: i32) -> (i32, i32, i32) {
    %c0_i32 = arith.constant 0 : i32
    %c0_i32_0 = arith.constant 0 : i32
    %c0_i32_1 = arith.constant 0 : i32
    return %arg0, %c0_i32, %c0_i32_0 : i32, i32, i32
  }
}

</mosaic_0001>

<llo_original>
// kernel: tpu_custom_call.1
$region0: #{tpu_custom_call.1}
  #allocation0 [shape = 'u32[]', space=smem, size = 0x4, offset = 0x4, fixed_abs, tag = 'smem constant byte address 0x4 - core index']
  #allocation1 [shape = 'u32[144,128]{1,0:T(1,128)}', space=vmem, size = 0x12000, scoped, tag = 'internal scratch']
  %s0 = inlined_call_operand.vmem [shape: f32[2,16,256], index: 0, kind: input, shape index: {}]
  %s1 = inlined_call_operand.vmem [shape: f32[9,256], index: 1, kind: input, shape index: {}]
  %s2 = inlined_call_operand.vmem [shape: f32[16,16], index: 2, kind: input, shape index: {}]
  %s3 = inlined_call_operand.vmem [shape: f32[16,1], index: 3, kind: input, shape index: {}]
  %s4 = inlined_call_operand.vmem [shape: f32[16,9], index: 4, kind: input, shape index: {}]
  %s5 = inlined_call_operand.vmem [shape: f32[16,1], index: 5, kind: input, shape index: {}]
  %s6 = inlined_call_operand.vmem [shape: f32[8,32], index: 6, kind: input, shape index: {}]
  %s7 = inlined_call_operand.vmem [shape: f32[8,1], index: 7, kind: input, shape index: {}]
  %s8 = inlined_call_operand.vmem [shape: f32[32,8], index: 8, kind: input, shape index: {}]
  %s9 = inlined_call_operand.vmem [shape: f32[32,1], index: 9, kind: input, shape index: {}]
  %s10 = inlined_call_operand.vmem [shape: f32[8,32], index: 10, kind: input, shape index: {}]
  %s11 = inlined_call_operand.vmem [shape: f32[8,1], index: 11, kind: input, shape index: {}]
  %s12 = inlined_call_operand.vmem [shape: f32[8,9], index: 12, kind: input, shape index: {}]
  %s13 = inlined_call_operand.vmem [shape: f32[8,1], index: 13, kind: input, shape index: {}]
  %s14 = inlined_call_operand.hbm [shape: f32[2,16,256], index: 14, kind: output, shape index: {}]
  %s15 = sld [smem:[#allocation0]]
  $region89: #{tpu_custom_call.1} parent=0
    _
  %s17 = ssub.s32 1, %s15
  %s18 = scalar_select 0, %s17, %s15
  $region1: #{tpu_custom_call.1} parent=0
    #allocation2 [shape = 'u8[32768]{0}', space=vmem, size = 0x8000, scoped, tag = 'output window, operand 0']
    #allocation3 [shape = 's32[2]{0}', space=sflag, size = 0x8, scoped, tag = 'scoped memory for tpu_custom_call.1']
    %19 = vsyncpa [#allocation3], 0
    %s20 = scalar_lea.sflag [#allocation3], 1
    %21 = vsyncpa %s20, 0
    loop: start=0, step=1, limit=4
    $region2: #{tpu_custom_call.1} parent=1 // loop_pre_header
      _
    $region3: #{tpu_custom_call.1} parent=1 // loop_header
      %s23 = sphi 0, %s27
      %p24 = scmp.ge.s32.totalorder %s23, 4
      %s33 = sphi 0, %s35
      %s36 = sphi 0, %s33
      %s37 = sphi 0, %s36
      %s53 = sphi 0, %s37
      %s57 = sphi 0, %s57
      %s59 = sphi 0, %s57
      %s60 = sphi 0, %s59
      %s74 = sphi 0, %s60
      %s78 = sphi 0, %s78
      %s80 = sphi 0, %s78
      %s81 = sphi 0, %s80
      %s95 = sphi 0, %s81
      %s99 = sphi 0, %s99
      %s101 = sphi 0, %s99
      %s102 = sphi 0, %s101
      %s116 = sphi 0, %s102
      %s120 = sphi 0, %s120
      %s122 = sphi 0, %s120
      %s123 = sphi 0, %s122
      %s137 = sphi 0, %s123
      %s141 = sphi 0, %s141
      %s143 = sphi 0, %s141
      %s144 = sphi 0, %s143
      %s158 = sphi 0, %s144
      %s162 = sphi 0, %s162
      %s164 = sphi 0, %s162
      %s165 = sphi 0, %s164
      %s179 = sphi 0, %s165
      %s183 = sphi 0, %s183
      %s185 = sphi 0, %s183
      %s186 = sphi 0, %s185
      %s200 = sphi 0, %s186
      %s204 = sphi 0, %s204
      %s206 = sphi 0, %s204
      %s207 = sphi 0, %s206
      %s221 = sphi 0, %s207
      %s225 = sphi 0, %s225
      %s227 = sphi 0, %s225
      %s228 = sphi 0, %s227
      %s242 = sphi 0, %s228
      %s246 = sphi 0, %s246
      %s248 = sphi 0, %s246
      %s249 = sphi 0, %s248
      %s263 = sphi 0, %s249
      %s267 = sphi 0, %s267
      %s269 = sphi 0, %s267
      %s270 = sphi 0, %s269
      %s284 = sphi 0, %s270
      %s288 = sphi 0, %s288
      %s290 = sphi 0, %s288
      %s291 = sphi 0, %s290
      %s305 = sphi 0, %s291
      %s309 = sphi 0, %s309
      %s311 = sphi 0, %s309
      %s312 = sphi 0, %s311
      %s326 = sphi 0, %s312
      %s332 = sphi 0, %s334
      %s335 = sphi 0, %s332
      %s336 = sphi 0, %s335
      %s352 = sphi 0, %s336
    $region4: #{tpu_custom_call.1} parent=1 // loop_header_branch
      %26 = sbr.rel (%p24) target = $region8
    $region5: #{tpu_custom_call.1} parent=1 // loop_body
      %s28 = ssub.s32 %s23, 1
      %s29 = ssub.s32 %s23, 2
      %s30 = sadd.s32 %s23, 1
      %s31 = ssub.s32 %s23, %s30
      %p32 = scmp.eq.s32.totalorder %s31, 0
      %s34 = sadd.s32 %s33, 1
      %s35 = scalar_select %p32, %s33, %s34
      %p38 = pneg %p32
      %p39 = scmp.eq.s32.totalorder %s23, 1
      %p40 = por %p38, %p39
      %p41 = scmp.ne.s32.totalorder %s33, %s36
      %p42 = scmp.eq.s32.totalorder %s23, 0
      %p43 = por %p41, %p42
      %p44 = scmp.ne.s32.totalorder %s33, %s36
      %p45 = scmp.eq.s32.totalorder %s28, 1
      %p46 = por %p44, %p45
      %p47 = scmp.ne.s32.totalorder %s36, %s37
      %p48 = scmp.eq.s32.totalorder %s28, 0
      %p49 = por %p47, %p48
      %p50 = scmp.ne.s32.totalorder %s36, %s37
      %p51 = scmp.eq.s32.totalorder %s29, 1
      %p52 = por %p50, %p51
      %p54 = scmp.ne.s32.totalorder %s37, %s53
      %p55 = scmp.eq.s32.totalorder %s29, 0
      %p56 = por %p54, %p55
      %s58 = sadd.s32 %s57, 1
      %p61 = scmp.eq.s32.totalorder %s23, 1
      %p62 = scmp.ne.s32.totalorder %s57, %s59
      %p63 = scmp.eq.s32.totalorder %s23, 0
      %p64 = por %p62, %p63
      %p65 = scmp.ne.s32.totalorder %s57, %s59
      %p66 = scmp.eq.s32.totalorder %s28, 1
      %p67 = por %p65, %p66
      %p68 = scmp.ne.s32.totalorder %s59, %s60
      %p69 = scmp.eq.s32.totalorder %s28, 0
      %p70 = por %p68, %p69
      %p71 = scmp.ne.s32.totalorder %s59, %s60
      %p72 = scmp.eq.s32.totalorder %s29, 1
      %p73 = por %p71, %p72
      %p75 = scmp.ne.s32.totalorder %s60, %s74
      %p76 = scmp.eq.s32.totalorder %s29, 0
      %p77 = por %p75, %p76
      %s79 = sadd.s32 %s78, 1
      %p82 = scmp.eq.s32.totalorder %s23, 1
      %p83 = scmp.ne.s32.totalorder %s78, %s80
      %p84 = scmp.eq.s32.totalorder %s23, 0
      %p85 = por %p83, %p84
      %p86 = scmp.ne.s32.totalorder %s78, %s80
      %p87 = scmp.eq.s32.totalorder %s28, 1
      %p88 = por %p86, %p87
      %p89 = scmp.ne.s32.totalorder %s80, %s81
      %p90 = scmp.eq.s32.totalorder %s28, 0
      %p91 = por %p89, %p90
      %p92 = scmp.ne.s32.totalorder %s80, %s81
      %p93 = scmp.eq.s32.totalorder %s29, 1
      %p94 = por %p92, %p93
      %p96 = scmp.ne.s32.totalorder %s81, %s95
      %p97 = scmp.eq.s32.totalorder %s29, 0
      %p98 = por %p96, %p97
      %s100 = sadd.s32 %s99, 1
      %p103 = scmp.eq.s32.totalorder %s23, 1
      %p104 = scmp.ne.s32.totalorder %s99, %s101
      %p105 = scmp.eq.s32.totalorder %s23, 0
      %p106 = por %p104, %p105
      %p107 = scmp.ne.s32.totalorder %s99, %s101
      %p108 = scmp.eq.s32.totalorder %s28, 1
      %p109 = por %p107, %p108
      %p110 = scmp.ne.s32.totalorder %s101, %s102
      %p111 = scmp.eq.s32.totalorder %s28, 0
      %p112 = por %p110, %p111
      %p113 = scmp.ne.s32.totalorder %s101, %s102
      %p114 = scmp.eq.s32.totalorder %s29, 1
      %p115 = por %p113, %p114
      %p117 = scmp.ne.s32.totalorder %s102, %s116
      %p118 = scmp.eq.s32.totalorder %s29, 0
      %p119 = por %p117, %p118
      %s121 = sadd.s32 %s120, 1
      %p124 = scmp.eq.s32.totalorder %s23, 1
      %p125 = scmp.ne.s32.totalorder %s120, %s122
      %p126 = scmp.eq.s32.totalorder %s23, 0
      %p127 = por %p125, %p126
      %p128 = scmp.ne.s32.totalorder %s120, %s122
      %p129 = scmp.eq.s32.totalorder %s28, 1
      %p130 = por %p128, %p129
      %p131 = scmp.ne.s32.totalorder %s122, %s123
      %p132 = scmp.eq.s32.totalorder %s28, 0
      %p133 = por %p131, %p132
      %p134 = scmp.ne.s32.totalorder %s122, %s123
      %p135 = scmp.eq.s32.totalorder %s29, 1
      %p136 = por %p134, %p135
      %p138 = scmp.ne.s32.totalorder %s123, %s137
      %p139 = scmp.eq.s32.totalorder %s29, 0
      %p140 = por %p138, %p139
      %s142 = sadd.s32 %s141, 1
      %p145 = scmp.eq.s32.totalorder %s23, 1
      %p146 = scmp.ne.s32.totalorder %s141, %s143
      %p147 = scmp.eq.s32.totalorder %s23, 0
      %p148 = por %p146, %p147
      %p149 = scmp.ne.s32.totalorder %s141, %s143
      %p150 = scmp.eq.s32.totalorder %s28, 1
      %p151 = por %p149, %p150
      %p152 = scmp.ne.s32.totalorder %s143, %s144
      %p153 = scmp.eq.s32.totalorder %s28, 0
      %p154 = por %p152, %p153
      %p155 = scmp.ne.s32.totalorder %s143, %s144
      %p156 = scmp.eq.s32.totalorder %s29, 1
      %p157 = por %p155, %p156
      %p159 = scmp.ne.s32.totalorder %s144, %s158
      %p160 = scmp.eq.s32.totalorder %s29, 0
      %p161 = por %p159, %p160
      %s163 = sadd.s32 %s162, 1
      %p166 = scmp.eq.s32.totalorder %s23, 1
      %p167 = scmp.ne.s32.totalorder %s162, %s164
      %p168 = scmp.eq.s32.totalorder %s23, 0
      %p169 = por %p167, %p168
      %p170 = scmp.ne.s32.totalorder %s162, %s164
      %p171 = scmp.eq.s32.totalorder %s28, 1
      %p172 = por %p170, %p171
      %p173 = scmp.ne.s32.totalorder %s164, %s165
      %p174 = scmp.eq.s32.totalorder %s28, 0
      %p175 = por %p173, %p174
      %p176 = scmp.ne.s32.totalorder %s164, %s165
      %p177 = scmp.eq.s32.totalorder %s29, 1
      %p178 = por %p176, %p177
      %p180 = scmp.ne.s32.totalorder %s165, %s179
      %p181 = scmp.eq.s32.totalorder %s29, 0
      %p182 = por %p180, %p181
      %s184 = sadd.s32 %s183, 1
      %p187 = scmp.eq.s32.totalorder %s23, 1
      %p188 = scmp.ne.s32.totalorder %s183, %s185
      %p189 = scmp.eq.s32.totalorder %s23, 0
      %p190 = por %p188, %p189
      %p191 = scmp.ne.s32.totalorder %s183, %s185
      %p192 = scmp.eq.s32.totalorder %s28, 1
      %p193 = por %p191, %p192
      %p194 = scmp.ne.s32.totalorder %s185, %s186
      %p195 = scmp.eq.s32.totalorder %s28, 0
      %p196 = por %p194, %p195
      %p197 = scmp.ne.s32.totalorder %s185, %s186
      %p198 = scmp.eq.s32.totalorder %s29, 1
      %p199 = por %p197, %p198
      %p201 = scmp.ne.s32.totalorder %s186, %s200
      %p202 = scmp.eq.s32.totalorder %s29, 0
      %p203 = por %p201, %p202
      %s205 = sadd.s32 %s204, 1
      %p208 = scmp.eq.s32.totalorder %s23, 1
      %p209 = scmp.ne.s32.totalorder %s204, %s206
      %p210 = scmp.eq.s32.totalorder %s23, 0
      %p211 = por %p209, %p210
      %p212 = scmp.ne.s32.totalorder %s204, %s206
      %p213 = scmp.eq.s32.totalorder %s28, 1
      %p214 = por %p212, %p213
      %p215 = scmp.ne.s32.totalorder %s206, %s207
      %p216 = scmp.eq.s32.totalorder %s28, 0
      %p217 = por %p215, %p216
      %p218 = scmp.ne.s32.totalorder %s206, %s207
      %p219 = scmp.eq.s32.totalorder %s29, 1
      %p220 = por %p218, %p219
      %p222 = scmp.ne.s32.totalorder %s207, %s221
      %p223 = scmp.eq.s32.totalorder %s29, 0
      %p224 = por %p222, %p223
      %s226 = sadd.s32 %s225, 1
      %p229 = scmp.eq.s32.totalorder %s23, 1
      %p230 = scmp.ne.s32.totalorder %s225, %s227
      %p231 = scmp.eq.s32.totalorder %s23, 0
      %p232 = por %p230, %p231
      %p233 = scmp.ne.s32.totalorder %s225, %s227
      %p234 = scmp.eq.s32.totalorder %s28, 1
      %p235 = por %p233, %p234
      %p236 = scmp.ne.s32.totalorder %s227, %s228
      %p237 = scmp.eq.s32.totalorder %s28, 0
      %p238 = por %p236, %p237
      %p239 = scmp.ne.s32.totalorder %s227, %s228
      %p240 = scmp.eq.s32.totalorder %s29, 1
      %p241 = por %p239, %p240
      %p243 = scmp.ne.s32.totalorder %s228, %s242
      %p244 = scmp.eq.s32.totalorder %s29, 0
      %p245 = por %p243, %p244
      %s247 = sadd.s32 %s246, 1
      %p250 = scmp.eq.s32.totalorder %s23, 1
      %p251 = scmp.ne.s32.totalorder %s246, %s248
      %p252 = scmp.eq.s32.totalorder %s23, 0
      %p253 = por %p251, %p252
      %p254 = scmp.ne.s32.totalorder %s246, %s248
      %p255 = scmp.eq.s32.totalorder %s28, 1
      %p256 = por %p254, %p255
      %p257 = scmp.ne.s32.totalorder %s248, %s249
      %p258 = scmp.eq.s32.totalorder %s28, 0
      %p259 = por %p257, %p258
      %p260 = scmp.ne.s32.totalorder %s248, %s249
      %p261 = scmp.eq.s32.totalorder %s29, 1
      %p262 = por %p260, %p261
      %p264 = scmp.ne.s32.totalorder %s249, %s263
      %p265 = scmp.eq.s32.totalorder %s29, 0
      %p266 = por %p264, %p265
      %s268 = sadd.s32 %s267, 1
      %p271 = scmp.eq.s32.totalorder %s23, 1
      %p272 = scmp.ne.s32.totalorder %s267, %s269
      %p273 = scmp.eq.s32.totalorder %s23, 0
      %p274 = por %p272, %p273
      %p275 = scmp.ne.s32.totalorder %s267, %s269
      %p276 = scmp.eq.s32.totalorder %s28, 1
      %p277 = por %p275, %p276
      %p278 = scmp.ne.s32.totalorder %s269, %s270
      %p279 = scmp.eq.s32.totalorder %s28, 0
      %p280 = por %p278, %p279
      %p281 = scmp.ne.s32.totalorder %s269, %s270
      %p282 = scmp.eq.s32.totalorder %s29, 1
      %p283 = por %p281, %p282
      %p285 = scmp.ne.s32.totalorder %s270, %s284
      %p286 = scmp.eq.s32.totalorder %s29, 0
      %p287 = por %p285, %p286
      %s289 = sadd.s32 %s288, 1
      %p292 = scmp.eq.s32.totalorder %s23, 1
      %p293 = scmp.ne.s32.totalorder %s288, %s290
      %p294 = scmp.eq.s32.totalorder %s23, 0
      %p295 = por %p293, %p294
      %p296 = scmp.ne.s32.totalorder %s288, %s290
      %p297 = scmp.eq.s32.totalorder %s28, 1
      %p298 = por %p296, %p297
      %p299 = scmp.ne.s32.totalorder %s290, %s291
      %p300 = scmp.eq.s32.totalorder %s28, 0
      %p301 = por %p299, %p300
      %p302 = scmp.ne.s32.totalorder %s290, %s291
      %p303 = scmp.eq.s32.totalorder %s29, 1
      %p304 = por %p302, %p303
      %p306 = scmp.ne.s32.totalorder %s291, %s305
      %p307 = scmp.eq.s32.totalorder %s29, 0
      %p308 = por %p306, %p307
      %s310 = sadd.s32 %s309, 1
      %p313 = scmp.eq.s32.totalorder %s23, 1
      %p314 = scmp.ne.s32.totalorder %s309, %s311
      %p315 = scmp.eq.s32.totalorder %s23, 0
      %p316 = por %p314, %p315
      %p317 = scmp.ne.s32.totalorder %s309, %s311
      %p318 = scmp.eq.s32.totalorder %s28, 1
      %p319 = por %p317, %p318
      %p320 = scmp.ne.s32.totalorder %s311, %s312
      %p321 = scmp.eq.s32.totalorder %s28, 0
      %p322 = por %p320, %p321
      %p323 = scmp.ne.s32.totalorder %s311, %s312
      %p324 = scmp.eq.s32.totalorder %s29, 1
      %p325 = por %p323, %p324
      %p327 = scmp.ne.s32.totalorder %s312, %s326
      %p328 = scmp.eq.s32.totalorder %s29, 0
      %p329 = por %p327, %p328
      %s330 = ssub.s32 %s23, %s30
      %p331 = scmp.eq.s32.totalorder %s330, 0
      %s333 = sadd.s32 %s332, 1
      %s334 = scalar_select %p331, %s332, %s333
      %p337 = pneg %p331
      %p338 = scmp.eq.s32.totalorder %s23, 1
      %p339 = por %p337, %p338
      %p340 = scmp.ne.s32.totalorder %s332, %s335
      %p341 = scmp.eq.s32.totalorder %s23, 0
      %p342 = por %p340, %p341
      %p343 = scmp.ne.s32.totalorder %s332, %s335
      %p344 = scmp.eq.s32.totalorder %s28, 1
      %p345 = por %p343, %p344
      %p346 = scmp.ne.s32.totalorder %s335, %s336
      %p347 = scmp.eq.s32.totalorder %s28, 0
      %p348 = por %p346, %p347
      %p349 = scmp.ne.s32.totalorder %s335, %s336
      %p350 = scmp.eq.s32.totalorder %s29, 1
      %p351 = por %p349, %p350
      %p353 = scmp.ne.s32.totalorder %s336, %s352
      %p354 = scmp.eq.s32.totalorder %s29, 0
      %p355 = por %p353, %p354
      %p356 = scmp.le.s32.totalorder 1, %s23
      %p357 = scmp.lt.s32.totalorder %s23, 3
      %p358 = pnand %p356, %p357
      %p359 = pneg %p358
      // Predicated region
      $region9: #{tpu_custom_call.1} parent=5 // pred_check
        _
      $region10: #{tpu_custom_call.1} parent=5 // pred_check_branch
        %361 = sbr.rel (%p358) target = $region12
      $region11: #{tpu_custom_call.1} parent=5 // pred_region
        %s362 = ssub.s32 %s23, 1
        // Predicated region
        $region13: #{tpu_custom_call.1} parent=11 // pred_check
          %p363 = pneg %p70
        $region14: #{tpu_custom_call.1} parent=11 // pred_check_branch
          %365 = sbr.rel (%p363) target = $region16
        $region15: #{tpu_custom_call.1} parent=11 // pred_region
          _
        $region16: #{tpu_custom_call.1} parent=11 // pred_fallthru
          _
        // Predicated region
        $region17: #{tpu_custom_call.1} parent=11 // pred_check
          %p366 = pneg %p91
        $region18: #{tpu_custom_call.1} parent=11 // pred_check_branch
          %368 = sbr.rel (%p366) target = $region20
        $region19: #{tpu_custom_call.1} parent=11 // pred_region
          _
        $region20: #{tpu_custom_call.1} parent=11 // pred_fallthru
          _
        // Predicated region
        $region21: #{tpu_custom_call.1} parent=11 // pred_check
          %p369 = pneg %p112
        $region22: #{tpu_custom_call.1} parent=11 // pred_check_branch
          %371 = sbr.rel (%p369) target = $region24
        $region23: #{tpu_custom_call.1} parent=11 // pred_region
          _
        $region24: #{tpu_custom_call.1} parent=11 // pred_fallthru
          _
        // Predicated region
        $region25: #{tpu_custom_call.1} parent=11 // pred_check
          %p372 = pneg %p133
        $region26: #{tpu_custom_call.1} parent=11 // pred_check_branch
          %374 = sbr.rel (%p372) target = $region28
        $region27: #{tpu_custom_call.1} parent=11 // pred_region
          _
        $region28: #{tpu_custom_call.1} parent=11 // pred_fallthru
          _
        // Predicated region
        $region29: #{tpu_custom_call.1} parent=11 // pred_check
          %p375 = pneg %p154
        $region30: #{tpu_custom_call.1} parent=11 // pred_check_branch
          %377 = sbr.rel (%p375) target = $region32
        $region31: #{tpu_custom_call.1} parent=11 // pred_region
          _
        $region32: #{tpu_custom_call.1} parent=11 // pred_fallthru
          _
        // Predicated region
        $region33: #{tpu_custom_call.1} parent=11 // pred_check
          %p378 = pneg %p175
        $region34: #{tpu_custom_call.1} parent=11 // pred_check_branch
          %380 = sbr.rel (%p378) target = $region36
        $region35: #{tpu_custom_call.1} parent=11 // pred_region
          _
        $region36: #{tpu_custom_call.1} parent=11 // pred_fallthru
          _
        // Predicated region
        $region37: #{tpu_custom_call.1} parent=11 // pred_check
          %p381 = pneg %p196
        $region38: #{tpu_custom_call.1} parent=11 // pred_check_branch
          %383 = sbr.rel (%p381) target = $region40
        $region39: #{tpu_custom_call.1} parent=11 // pred_region
          _
        $region40: #{tpu_custom_call.1} parent=11 // pred_fallthru
          _
        // Predicated region
        $region41: #{tpu_custom_call.1} parent=11 // pred_check
          %p384 = pneg %p217
        $region42: #{tpu_custom_call.1} parent=11 // pred_check_branch
          %386 = sbr.rel (%p384) target = $region44
        $region43: #{tpu_custom_call.1} parent=11 // pred_region
          _
        $region44: #{tpu_custom_call.1} parent=11 // pred_fallthru
          _
        // Predicated region
        $region45: #{tpu_custom_call.1} parent=11 // pred_check
          %p387 = pneg %p238
        $region46: #{tpu_custom_call.1} parent=11 // pred_check_branch
          %389 = sbr.rel (%p387) target = $region48
        $region47: #{tpu_custom_call.1} parent=11 // pred_region
          _
        $region48: #{tpu_custom_call.1} parent=11 // pred_fallthru
          _
        // Predicated region
        $region49: #{tpu_custom_call.1} parent=11 // pred_check
          %p390 = pneg %p259
        $region50: #{tpu_custom_call.1} parent=11 // pred_check_branch
          %392 = sbr.rel (%p390) target = $region52
        $region51: #{tpu_custom_call.1} parent=11 // pred_region
          _
        $region52: #{tpu_custom_call.1} parent=11 // pred_fallthru
          _
        // Predicated region
        $region53: #{tpu_custom_call.1} parent=11 // pred_check
          %p393 = pneg %p280
        $region54: #{tpu_custom_call.1} parent=11 // pred_check_branch
          %395 = sbr.rel (%p393) target = $region56
        $region55: #{tpu_custom_call.1} parent=11 // pred_region
          _
        $region56: #{tpu_custom_call.1} parent=11 // pred_fallthru
          _
        // Predicated region
        $region57: #{tpu_custom_call.1} parent=11 // pred_check
          %p396 = pneg %p301
        $region58: #{tpu_custom_call.1} parent=11 // pred_check_branch
          %398 = sbr.rel (%p396) target = $region60
        $region59: #{tpu_custom_call.1} parent=11 // pred_region
          _
        $region60: #{tpu_custom_call.1} parent=11 // pred_fallthru
          _
        // Predicated region
        $region61: #{tpu_custom_call.1} parent=11 // pred_check
          %p399 = pneg %p322
        $region62: #{tpu_custom_call.1} parent=11 // pred_check_branch
          %401 = sbr.rel (%p399) target = $region64
        $region63: #{tpu_custom_call.1} parent=11 // pred_region
          _
        $region64: #{tpu_custom_call.1} parent=11 // pred_fallthru
          _
      $region12: #{tpu_custom_call.1} parent=5 // pred_fallthru
        _
      %p402 = scmp.lt.s32.totalorder %s23, 2
      // Predicated region
      $region65: #{tpu_custom_call.1} parent=5 // pred_check
        %p403 = pneg %p402
      $region66: #{tpu_custom_call.1} parent=5 // pred_check_branch
        %405 = sbr.rel (%p403) target = $region68
      $region67: #{tpu_custom_call.1} parent=5 // pred_region
        // Predicated region
        $region69: #{tpu_custom_call.1} parent=67 // pred_check
          %p406 = pneg %p43
        $region70: #{tpu_custom_call.1} parent=67 // pred_check_branch
          %408 = sbr.rel (%p406) target = $region72
        $region71: #{tpu_custom_call.1} parent=67 // pred_region
          %p409 = scmp.lt.s32.totalorder %s23, 1
          %s410 = scalar_select %p409, %s23, 1
          %s411 = smul.addr %s410, 4
          %s412 = smul.addr %s411, 8
          %s413 = scalar_lea.vmem %s0, %s412
        $region72: #{tpu_custom_call.1} parent=67 // pred_fallthru
          _
      $region68: #{tpu_custom_call.1} parent=5 // pred_fallthru
        _
      %p414 = scmp.le.s32.totalorder 1, %s23
      %p415 = scmp.lt.s32.totalorder %s23, 3
      %p416 = pnand %p414, %p415
      %p417 = pneg %p416
      // Predicated region
      $region73: #{tpu_custom_call.1} parent=5 // pred_check
        _
      $region74: #{tpu_custom_call.1} parent=5 // pred_check_branch
        %419 = sbr.rel (%p416) target = $region76
      $region75: #{tpu_custom_call.1} parent=5 // pred_region
        %s420 = ssub.s32 %s23, 1
        %p421 = scmp.lt.s32.totalorder %s28, 1
        %s422 = scalar_select %p421, %s28, 1
        %s423 = smul.addr %s422, 4
        %s424 = smul.addr %s423, 8
        %s425 = scalar_lea.vmem %s0, %s424
        %p426 = pneg %p49
        %p427 = pneg %p46
        %p428 = pneg %p70
        %p429 = pneg %p67
        %p430 = pneg %p91
        %p431 = pneg %p88
        %p432 = pneg %p112
        %p433 = pneg %p109
        %p434 = pneg %p133
        %p435 = pneg %p130
        %p436 = pneg %p154
        %p437 = pneg %p151
        %p438 = pneg %p175
        %p439 = pneg %p172
        %p440 = pneg %p196
        %p441 = pneg %p193
        %p442 = pneg %p217
        %p443 = pneg %p214
        %p444 = pneg %p238
        %p445 = pneg %p235
        %p446 = pneg %p259
        %p447 = pneg %p256
        %p448 = pneg %p280
        %p449 = pneg %p277
        %p450 = pneg %p301
        %p451 = pneg %p298
        %p452 = pneg %p322
        %p453 = pneg %p319
        %p454 = pneg %p348
        %p455 = pneg %p345
        %s456 = sand.u32 %s335, 1
        %s457 = scalar_lea.sflag [#allocation3], %s456
        %s458 = sand.u32 %s335, 1
        %s459 = smul.addr %s458, 32
        %s460 = scalar_lea.vmem [#allocation2], %s459
        %p461 = scmp.lt.s32.totalorder %s28, 1
        %s462 = scalar_select %p461, %s28, 1
        %s463 = smul.addr %s462, 4
        %s464 = smul.addr %s463, 8
        %s465 = scalar_lea.vmem %s0, %s464
        %v466 = vld [vmem:[%s1] sm:$0xff]
        %v467 = vld [vmem:[%s1 + $0x8] sm:$0xff]
        %v468 = vld [vmem:[%s1 + $0x10] sm:$0x1]
        %v469 = vld [vmem:[%s1 + $0x18] sm:$0x1]
        %v470 = vld [vmem:[%s465] sm:$0xff]
        %v471 = vld [vmem:[%s465 + $0x8] sm:$0xff]
        %v472 = vld [vmem:[%s465 + $0x10] sm:$0xff]
        %v473 = vld [vmem:[%s465 + $0x18] sm:$0xff]
        %v474 = vld [vmem:[%s2] sm:$0xff]
        %v475 = vld [vmem:[%s2 + $0x8] sm:$0xff]
        %v476 = vld [vmem:[%s3] sm:$0xff]
        %v477 = vld [vmem:[%s3 + $0x8] sm:$0xff]
        %479 = vset.pattern.permute.xlu0 0
        %480 = vperm.xlu0 %479, %v476
        %v481 = vpop.permute.xlu0 %480
        %484 = vset.pattern.permute.xlu0 0
        %485 = vperm.xlu0 %484, %v477
        %v486 = vpop.permute.xlu0 %485
        %vm488 = vcmask 130048
        %v490 = vsel %vm488, %v474, 0
        %v493 = vsel %vm488, %v475, 0
        %495 = vmatprep.subr.mxu0 %v471
        %496 = vmatpush1.msra.mxu0 %v470
        %497 = vmatprep.subr.mxu0 %v473
        %498 = vmatpush1.msra.mxu0 %v472
        %499 = vmatprep.subr.mxu0 0.0
        %500 = vmatpush1.msra.mxu0 0.0
        %501 = vmatprep.subr.mxu0 0.0
        %502 = vmatpush1.msra.mxu0 0.0
        %503 = vmatprep.subr.mxu0 0.0
        %504 = vmatpush1.msra.mxu0 0.0
        %505 = vmatprep.subr.mxu0 0.0
        %506 = vmatpush1.msra.mxu0 0.0
        %507 = vmatprep.subr.mxu0 0.0
        %508 = vmatpush1.msra.mxu0 0.0
        %509 = vmatprep.subr.mxu0 0.0
        %510 = vmatpush1.msra.mxu0 0.0
        %511 = vmatprep.subr.mxu0 0.0
        %512 = vmatpush1.msra.mxu0 0.0
        %513 = vmatprep.subr.mxu0 0.0
        %514 = vmatpush1.msra.mxu0 0.0
        %515 = vmatprep.subr.mxu0 0.0
        %516 = vmatpush1.msra.mxu0 0.0
        %517 = vmatprep.subr.mxu0 0.0
        %518 = vmatpush1.msra.mxu0 0.0
        %519 = vmatprep.subr.mxu0 0.0
        %520 = vmatpush1.msra.mxu0 0.0
        %521 = vmatprep.subr.mxu0 0.0
        %522 = vmatpush1.msra.mxu0 0.0
        %523 = vmatprep.subr.mxu0 0.0
        %524 = vmatpush1.msra.mxu0 0.0
        %525 = vmatprep.subr.mxu0 0.0
        %526 = vmatpush1.msra.mxu0 0.0
        %527 = vmatprep.subr.mxu0 0.0
        %528 = vmatpush1.msra.mxu0 0.0
        %529 = vmatprep.subr.mxu0 0.0
        %530 = vmatpush1.msra.mxu0 0.0
        %531 = vmatprep.subr.mxu0 0.0
        %532 = vmatpush1.msra.mxu0 0.0
        %533 = vmatprep.subr.mxu0 0.0
        %534 = vmatpush1.msra.mxu0 0.0
        %535 = vmatprep.subr.mxu0 0.0
        %536 = vmatpush1.msra.mxu0 0.0
        %537 = vmatprep.subr.mxu0 0.0
        %538 = vmatpush1.msra.mxu0 0.0
        %539 = vmatprep.subr.mxu0 0.0
        %540 = vmatpush1.msra.mxu0 0.0
        %541 = vmatprep.subr.mxu0 0.0
        %542 = vmatpush1.msra.mxu0 0.0
        %543 = vmatprep.subr.mxu0 0.0
        %544 = vmatpush1.msra.mxu0 0.0
        %545 = vmatprep.subr.mxu0 0.0
        %546 = vmatpush1.msra.mxu0 0.0
        %547 = vmatprep.subr.mxu0 0.0
        %548 = vmatpush1.msra.mxu0 0.0
        %549 = vmatprep.subr.mxu0 0.0
        %550 = vmatpush1.msra.mxu0 0.0
        %551 = vmatprep.subr.mxu0 0.0
        %552 = vmatpush1.msra.mxu0 0.0
        %553 = vmatprep.subr.mxu0 0.0
        %554 = vmatpush1.msra.mxu0 0.0
        %555 = vmatprep.subr.mxu0 0.0
        %556 = vmatpush1.msra.mxu0 0.0
        %557 = vmatprep.subr.mxu0 0.0
        %558 = vmatpush1.msra.mxu0 0.0
        %559 = vmatprep.mubr.f32.mxu0 0.0
        %560 = vmatmul.mubr.f32.gmra.mrb[0].mxu0 %v490
        %v561 = vpop.f32.mrb[0].mxu0
        %v562 = vadd.f32 %v481, %v561
        %v563 = vpop.f32.mrb[0].mxu0
        %v564 = vadd.f32 %v481, %v563
        %565 = vmatprep.mubr.f32.mxu0 0.0
        %566 = vmatmul.mubr.f32.gmra.mrb[0].mxu0 %v493
        %v567 = vpop.f32.mrb[0].mxu0
        %v568 = vadd.f32 %v486, %v567
        %v569 = vpop.f32.mrb[0].mxu0
        %v570 = vadd.f32 %v486, %v569
        %571 = vdwg.mxu0
        %v572 = vmax.f32 %v562, 0.0
        %v573 = vmax.f32 %v564, 0.0
        %v574 = vmax.f32 %v568, 0.0
        %v575 = vmax.f32 %v570, 0.0
        %v576 = vld [vmem:[%s4] sm:$0xff]
        %v577 = vld [vmem:[%s4 + $0x8] sm:$0xff]
        %578 = vrot.lane.b32.xlu0 %v572, 17
        %v579 = vpop.permute.xlu0 %578
        %580 = vrot.lane.b32.xlu0 %v574, 17
        %v581 = vpop.permute.xlu0 %580
        %582 = vrot.lane.b32.xlu0 %v573, 17
        %v583 = vpop.permute.xlu0 %582
        %584 = vrot.lane.b32.xlu0 %v575, 17
        %v585 = vpop.permute.xlu0 %584
        %v586 = vlaneseq
        %v587 = vand.u32 %v586, 127
        %vm588 = vcmp.lt.s32.totalorder %v587, 17
        %v589 = vsel %vm588, %v579, %v583
        %v590 = vsel %vm588, %v581, %v585
        %v591 = vsel %vm588, %v583, %v579
        %v592 = vsel %vm588, %v585, %v581
        %v593 = vlaneseq
        %v594 = vshrl.u32 %v593, 7
        %v595 = vsub.s32 0, %v594
        %v596 = vrot.slane %v466, %v595
        %v597 = vlaneseq
        %v598 = vshrl.u32 %v597, 7
        %v599 = vsub.s32 0, %v598
        %v600 = vrot.slane %v467, %v599
        %v601 = vmul.f32 %v591, %v596
        %v602 = vmul.f32 %v589, %v600
        %v603 = vmul.f32 %v592, %v596
        %v604 = vmul.f32 %v590, %v600
        %606 = vset.pattern.permute.xlu0 0
        %607 = vperm.xlu0 %606, %v576
        %v608 = vpop.permute.xlu0 %607
        %611 = vset.pattern.permute.xlu0 0
        %612 = vperm.xlu0 %611, %v577
        %v613 = vpop.permute.xlu0 %612
        %v615 = vmul.f32 %v601, %v608
        %v616 = vmul.f32 %v602, %v608
        %v617 = vmul.f32 %v603, %v613
        %v618 = vmul.f32 %v604, %v613
        %v619 = vadd.f32 %v615, 0.0
        %v620 = vadd.f32 %v616, 0.0
        %v621 = vadd.f32 %v617, 0.0
        %v622 = vadd.f32 %v618, 0.0
        %623 = vrot.lane.b32.xlu0 %v572, 16
        %v624 = vpop.permute.xlu0 %623
        %625 = vrot.lane.b32.xlu0 %v574, 16
        %v626 = vpop.permute.xlu0 %625
        %627 = vrot.lane.b32.xlu0 %v573, 16
        %v628 = vpop.permute.xlu0 %627
        %629 = vrot.lane.b32.xlu0 %v575, 16
        %v630 = vpop.permute.xlu0 %629
        %vm631 = vcmp.lt.s32.totalorder %v587, 16
        %v632 = vsel %vm631, %v624, %v628
        %v633 = vsel %vm631, %v626, %v630
        %v634 = vsel %vm631, %v628, %v624
        %v635 = vsel %vm631, %v630, %v626
        %v636 = vlaneseq
        %v637 = vshrl.u32 %v636, 7
        %v638 = vsub.s32 1, %v637
        %v639 = vrot.slane %v466, %v638
        %v640 = vlaneseq
        %v641 = vshrl.u32 %v640, 7
        %v642 = vsub.s32 1, %v641
        %v643 = vrot.slane %v467, %v642
        %v644 = vmul.f32 %v634, %v639
        %v645 = vmul.f32 %v632, %v643
        %v646 = vmul.f32 %v635, %v639
        %v647 = vmul.f32 %v633, %v643
        %648 = vset.pattern.permute.xlu0 1
        %649 = vperm.xlu0 %648, %v576
        %v650 = vpop.permute.xlu0 %649
        %652 = vset.pattern.permute.xlu0 1
        %653 = vperm.xlu0 %652, %v577
        %v654 = vpop.permute.xlu0 %653
        %v656 = vmul.f32 %v644, %v650
        %v657 = vmul.f32 %v645, %v650
        %v658 = vmul.f32 %v646, %v654
        %v659 = vmul.f32 %v647, %v654
        %v660 = vadd.f32 %v619, %v656
        %v661 = vadd.f32 %v620, %v657
        %v662 = vadd.f32 %v621, %v658
        %v663 = vadd.f32 %v622, %v659
        %664 = vrot.lane.b32.xlu0 %v572, 15
        %v665 = vpop.permute.xlu0 %664
        %666 = vrot.lane.b32.xlu0 %v574, 15
        %v667 = vpop.permute.xlu0 %666
        %668 = vrot.lane.b32.xlu0 %v573, 15
        %v669 = vpop.permute.xlu0 %668
        %670 = vrot.lane.b32.xlu0 %v575, 15
        %v671 = vpop.permute.xlu0 %670
        %vm672 = vcmp.lt.s32.totalorder %v587, 15
        %v673 = vsel %vm672, %v665, %v669
        %v674 = vsel %vm672, %v667, %v671
        %v675 = vsel %vm672, %v669, %v665
        %v676 = vsel %vm672, %v671, %v667
        %v677 = vlaneseq
        %v678 = vshrl.u32 %v677, 7
        %v679 = vsub.s32 2, %v678
        %v680 = vrot.slane %v466, %v679
        %v681 = vlaneseq
        %v682 = vshrl.u32 %v681, 7
        %v683 = vsub.s32 2, %v682
        %v684 = vrot.slane %v467, %v683
        %v685 = vmul.f32 %v675, %v680
        %v686 = vmul.f32 %v673, %v684
        %v687 = vmul.f32 %v676, %v680
        %v688 = vmul.f32 %v674, %v684
        %689 = vset.pattern.permute.xlu0 2
        %690 = vperm.xlu0 %689, %v576
        %v691 = vpop.permute.xlu0 %690
        %693 = vset.pattern.permute.xlu0 2
        %694 = vperm.xlu0 %693, %v577
        %v695 = vpop.permute.xlu0 %694
        %v697 = vmul.f32 %v685, %v691
        %v698 = vmul.f32 %v686, %v691
        %v699 = vmul.f32 %v687, %v695
        %v700 = vmul.f32 %v688, %v695
        %v701 = vadd.f32 %v660, %v697
        %v702 = vadd.f32 %v661, %v698
        %v703 = vadd.f32 %v662, %v699
        %v704 = vadd.f32 %v663, %v700
        %705 = vrot.lane.b32.xlu0 %v572, 1
        %v706 = vpop.permute.xlu0 %705
        %707 = vrot.lane.b32.xlu0 %v574, 1
        %v708 = vpop.permute.xlu0 %707
        %709 = vrot.lane.b32.xlu0 %v573, 1
        %v710 = vpop.permute.xlu0 %709
        %711 = vrot.lane.b32.xlu0 %v575, 1
        %v712 = vpop.permute.xlu0 %711
        %vm713 = vcmp.lt.s32.totalorder %v587, 1
        %v714 = vsel %vm713, %v706, %v710
        %v715 = vsel %vm713, %v708, %v712
        %v716 = vsel %vm713, %v710, %v706
        %v717 = vsel %vm713, %v712, %v708
        %v718 = vlaneseq
        %v719 = vshrl.u32 %v718, 7
        %v720 = vsub.s32 3, %v719
        %v721 = vrot.slane %v466, %v720
        %v722 = vlaneseq
        %v723 = vshrl.u32 %v722, 7
        %v724 = vsub.s32 3, %v723
        %v725 = vrot.slane %v467, %v724
        %v726 = vmul.f32 %v716, %v721
        %v727 = vmul.f32 %v714, %v725
        %v728 = vmul.f32 %v717, %v721
        %v729 = vmul.f32 %v715, %v725
        %730 = vset.pattern.permute.xlu0 3
        %731 = vperm.xlu0 %730, %v576
        %v732 = vpop.permute.xlu0 %731
        %734 = vset.pattern.permute.xlu0 3
        %735 = vperm.xlu0 %734, %v577
        %v736 = vpop.permute.xlu0 %735
        %v738 = vmul.f32 %v726, %v732
        %v739 = vmul.f32 %v727, %v732
        %v740 = vmul.f32 %v728, %v736
        %v741 = vmul.f32 %v729, %v736
        %v742 = vadd.f32 %v701, %v738
        %v743 = vadd.f32 %v702, %v739
        %v744 = vadd.f32 %v703, %v740
        %v745 = vadd.f32 %v704, %v741
        %v746 = vlaneseq
        %v747 = vshrl.u32 %v746, 7
        %v748 = vsub.s32 4, %v747
        %v749 = vrot.slane %v466, %v748
        %v750 = vlaneseq
        %v751 = vshrl.u32 %v750, 7
        %v752 = vsub.s32 4, %v751
        %v753 = vrot.slane %v467, %v752
        %v754 = vmul.f32 %v572, %v749
        %v755 = vmul.f32 %v573, %v753
        %v756 = vmul.f32 %v574, %v749
        %v757 = vmul.f32 %v575, %v753
        %758 = vset.pattern.permute.xlu0 4
        %759 = vperm.xlu0 %758, %v576
        %v760 = vpop.permute.xlu0 %759
        %762 = vset.pattern.permute.xlu0 4
        %763 = vperm.xlu0 %762, %v577
        %v764 = vpop.permute.xlu0 %763
        %v766 = vmul.f32 %v754, %v760
        %v767 = vmul.f32 %v755, %v760
        %v768 = vmul.f32 %v756, %v764
        %v769 = vmul.f32 %v757, %v764
        %v770 = vadd.f32 %v742, %v766
        %v771 = vadd.f32 %v743, %v767
        %v772 = vadd.f32 %v744, %v768
        %v773 = vadd.f32 %v745, %v769
        %774 = vrot.lane.b32.xlu0 %v572, 127
        %v775 = vpop.permute.xlu0 %774
        %776 = vrot.lane.b32.xlu0 %v574, 127
        %v777 = vpop.permute.xlu0 %776
        %778 = vrot.lane.b32.xlu0 %v573, 127
        %v779 = vpop.permute.xlu0 %778
        %780 = vrot.lane.b32.xlu0 %v575, 127
        %v781 = vpop.permute.xlu0 %780
        %vm782 = vcmp.lt.s32.totalorder %v587, 127
        %v783 = vsel %vm782, %v775, %v779
        %v784 = vsel %vm782, %v777, %v781
        %v785 = vsel %vm782, %v779, %v775
        %v786 = vsel %vm782, %v781, %v777
        %v787 = vlaneseq
        %v788 = vshrl.u32 %v787, 7
        %v789 = vsub.s32 5, %v788
        %v790 = vrot.slane %v466, %v789
        %v791 = vlaneseq
        %v792 = vshrl.u32 %v791, 7
        %v793 = vsub.s32 5, %v792
        %v794 = vrot.slane %v467, %v793
        %v795 = vmul.f32 %v783, %v790
        %v796 = vmul.f32 %v785, %v794
        %v797 = vmul.f32 %v784, %v790
        %v798 = vmul.f32 %v786, %v794
        %799 = vset.pattern.permute.xlu0 5
        %800 = vperm.xlu0 %799, %v576
        %v801 = vpop.permute.xlu0 %800
        %803 = vset.pattern.permute.xlu0 5
        %804 = vperm.xlu0 %803, %v577
        %v805 = vpop.permute.xlu0 %804
        %v807 = vmul.f32 %v795, %v801
        %v808 = vmul.f32 %v796, %v801
        %v809 = vmul.f32 %v797, %v805
        %v810 = vmul.f32 %v798, %v805
        %v811 = vadd.f32 %v770, %v807
        %v812 = vadd.f32 %v771, %v808
        %v813 = vadd.f32 %v772, %v809
        %v814 = vadd.f32 %v773, %v810
        %815 = vrot.lane.b32.xlu0 %v572, 113
        %v816 = vpop.permute.xlu0 %815
        %817 = vrot.lane.b32.xlu0 %v574, 113
        %v818 = vpop.permute.xlu0 %817
        %819 = vrot.lane.b32.xlu0 %v573, 113
        %v820 = vpop.permute.xlu0 %819
        %821 = vrot.lane.b32.xlu0 %v575, 113
        %v822 = vpop.permute.xlu0 %821
        %vm823 = vcmp.lt.s32.totalorder %v587, 113
        %v824 = vsel %vm823, %v816, %v820
        %v825 = vsel %vm823, %v818, %v822
        %v826 = vsel %vm823, %v820, %v816
        %v827 = vsel %vm823, %v822, %v818
        %v828 = vlaneseq
        %v829 = vshrl.u32 %v828, 7
        %v830 = vsub.s32 6, %v829
        %v831 = vrot.slane %v466, %v830
        %v832 = vlaneseq
        %v833 = vshrl.u32 %v832, 7
        %v834 = vsub.s32 6, %v833
        %v835 = vrot.slane %v467, %v834
        %v836 = vmul.f32 %v824, %v831
        %v837 = vmul.f32 %v826, %v835
        %v838 = vmul.f32 %v825, %v831
        %v839 = vmul.f32 %v827, %v835
        %840 = vset.pattern.permute.xlu0 6
        %841 = vperm.xlu0 %840, %v576
        %v842 = vpop.permute.xlu0 %841
        %844 = vset.pattern.permute.xlu0 6
        %845 = vperm.xlu0 %844, %v577
        %v846 = vpop.permute.xlu0 %845
        %v848 = vmul.f32 %v836, %v842
        %v849 = vmul.f32 %v837, %v842
        %v850 = vmul.f32 %v838, %v846
        %v851 = vmul.f32 %v839, %v846
        %v852 = vadd.f32 %v811, %v848
        %v853 = vadd.f32 %v812, %v849
        %v854 = vadd.f32 %v813, %v850
        %v855 = vadd.f32 %v814, %v851
        %856 = vrot.lane.b32.xlu0 %v572, 112
        %v857 = vpop.permute.xlu0 %856
        %858 = vrot.lane.b32.xlu0 %v574, 112
        %v859 = vpop.permute.xlu0 %858
        %860 = vrot.lane.b32.xlu0 %v573, 112
        %v861 = vpop.permute.xlu0 %860
        %862 = vrot.lane.b32.xlu0 %v575, 112
        %v863 = vpop.permute.xlu0 %862
        %vm864 = vcmp.lt.s32.totalorder %v587, 112
        %v865 = vsel %vm864, %v857, %v861
        %v866 = vsel %vm864, %v859, %v863
        %v867 = vsel %vm864, %v861, %v857
        %v868 = vsel %vm864, %v863, %v859
        %v869 = vlaneseq
        %v870 = vshrl.u32 %v869, 7
        %v871 = vsub.s32 7, %v870
        %v872 = vrot.slane %v466, %v871
        %v873 = vlaneseq
        %v874 = vshrl.u32 %v873, 7
        %v875 = vsub.s32 7, %v874
        %v876 = vrot.slane %v467, %v875
        %v877 = vmul.f32 %v865, %v872
        %v878 = vmul.f32 %v867, %v876
        %v879 = vmul.f32 %v866, %v872
        %v880 = vmul.f32 %v868, %v876
        %881 = vset.pattern.permute.xlu0 7
        %882 = vperm.xlu0 %881, %v576
        %v883 = vpop.permute.xlu0 %882
        %885 = vset.pattern.permute.xlu0 7
        %886 = vperm.xlu0 %885, %v577
        %v887 = vpop.permute.xlu0 %886
        %v889 = vmul.f32 %v877, %v883
        %v890 = vmul.f32 %v878, %v883
        %v891 = vmul.f32 %v879, %v887
        %v892 = vmul.f32 %v880, %v887
        %v893 = vadd.f32 %v852, %v889
        %v894 = vadd.f32 %v853, %v890
        %v895 = vadd.f32 %v854, %v891
        %v896 = vadd.f32 %v855, %v892
        %897 = vrot.lane.b32.xlu0 %v572, 111
        %v898 = vpop.permute.xlu0 %897
        %899 = vrot.lane.b32.xlu0 %v574, 111
        %v900 = vpop.permute.xlu0 %899
        %901 = vrot.lane.b32.xlu0 %v573, 111
        %v902 = vpop.permute.xlu0 %901
        %903 = vrot.lane.b32.xlu0 %v575, 111
        %v904 = vpop.permute.xlu0 %903
        %vm905 = vcmp.lt.s32.totalorder %v587, 111
        %v906 = vsel %vm905, %v898, %v902
        %v907 = vsel %vm905, %v900, %v904
        %v908 = vsel %vm905, %v902, %v898
        %v909 = vsel %vm905, %v904, %v900
        %v910 = vlaneseq
        %v911 = vshrl.u32 %v910, 7
        %v912 = vsub.s32 0, %v911
        %v913 = vrot.slane %v468, %v912
        %v914 = vlaneseq
        %v915 = vshrl.u32 %v914, 7
        %v916 = vsub.s32 0, %v915
        %v917 = vrot.slane %v469, %v916
        %v918 = vmul.f32 %v906, %v913
        %v919 = vmul.f32 %v908, %v917
        %v920 = vmul.f32 %v907, %v913
        %v921 = vmul.f32 %v909, %v917
        %922 = vset.pattern.permute.xlu0 8
        %923 = vperm.xlu0 %922, %v576
        %v924 = vpop.permute.xlu0 %923
        %926 = vset.pattern.permute.xlu0 8
        %927 = vperm.xlu0 %926, %v577
        %v928 = vpop.permute.xlu0 %927
        %v930 = vmul.f32 %v918, %v924
        %v931 = vmul.f32 %v919, %v924
        %v932 = vmul.f32 %v920, %v928
        %v933 = vmul.f32 %v921, %v928
        %v934 = vadd.f32 %v893, %v930
        %v935 = vadd.f32 %v894, %v931
        %v936 = vadd.f32 %v895, %v932
        %v937 = vadd.f32 %v896, %v933
        %v938 = vld [vmem:[%s5] sm:$0xff]
        %v939 = vld [vmem:[%s5 + $0x8] sm:$0xff]
        %941 = vset.pattern.permute.xlu0 0
        %942 = vperm.xlu0 %941, %v938
        %v943 = vpop.permute.xlu0 %942
        %946 = vset.pattern.permute.xlu0 0
        %947 = vperm.xlu0 %946, %v939
        %v948 = vpop.permute.xlu0 %947
        %v950 = vadd.f32 %v934, %v943
        %v951 = vadd.f32 %v935, %v943
        %v952 = vadd.f32 %v936, %v948
        %v953 = vadd.f32 %v937, %v948
        %v954 = vmax.f32 %v950, 0.0
        %v955 = vmax.f32 %v951, 0.0
        %v956 = vmax.f32 %v952, 0.0
        %v957 = vmax.f32 %v953, 0.0
        %v958 = vadd.f32 %v572, %v573
        %959 = vadd.xlane.f32.xlu0 %v958
        %v960 = vpop.xlane.xlu0 %959
        %v961 = vadd.f32 %v574, %v575
        %962 = vadd.xlane.f32.xlu0 %v961
        %v963 = vpop.xlane.xlu0 %962
        %v964 = vrcp.pop 256.0
        %v965 = vmul.f32 %v960, %v964
        %v966 = vmul.f32 %v963, %v964
        %v967 = vadd.f32 %v954, %v955
        %968 = vadd.xlane.f32.xlu0 %v967
        %v969 = vpop.xlane.xlu0 %968
        %v970 = vadd.f32 %v956, %v957
        %971 = vadd.xlane.f32.xlu0 %v970
        %v972 = vpop.xlane.xlu0 %971
        %v973 = vmul.f32 %v969, %v964
        %v974 = vmul.f32 %v972, %v964
        %v975 = vld [vmem:[%s6] sm:$0xff]
        %977 = vrot.lane.b32.xlu0 %v975, 112
        %v978 = vpop.permute.xlu0 %977
        %v979 = vsel %vm488, %v978, 0
        %981 = vmatprep.subr.mxu0 0.0
        %982 = vmatpush1.msra.mxu0 %v973
        %983 = vmatprep.subr.mxu0 0.0
        %984 = vmatpush1.msra.mxu0 %v974
        %985 = vmatprep.subr.mxu0 0.0
        %986 = vmatpush1.msra.mxu0 0.0
        %987 = vmatprep.subr.mxu0 0.0
        %988 = vmatpush1.msra.mxu0 0.0
        %989 = vmatprep.subr.mxu0 0.0
        %990 = vmatpush1.msra.mxu0 0.0
        %991 = vmatprep.subr.mxu0 0.0
        %992 = vmatpush1.msra.mxu0 0.0
        %993 = vmatprep.subr.mxu0 0.0
        %994 = vmatpush1.msra.mxu0 0.0
        %995 = vmatprep.subr.mxu0 0.0
        %996 = vmatpush1.msra.mxu0 0.0
        %997 = vmatprep.subr.mxu0 0.0
        %998 = vmatpush1.msra.mxu0 0.0
        %999 = vmatprep.subr.mxu0 0.0
        %1000 = vmatpush1.msra.mxu0 0.0
        %1001 = vmatprep.subr.mxu0 0.0
        %1002 = vmatpush1.msra.mxu0 0.0
        %1003 = vmatprep.subr.mxu0 0.0
        %1004 = vmatpush1.msra.mxu0 0.0
        %1005 = vmatprep.subr.mxu0 0.0
        %1006 = vmatpush1.msra.mxu0 0.0
        %1007 = vmatprep.subr.mxu0 0.0
        %1008 = vmatpush1.msra.mxu0 0.0
        %1009 = vmatprep.subr.mxu0 0.0
        %1010 = vmatpush1.msra.mxu0 0.0
        %1011 = vmatprep.subr.mxu0 0.0
        %1012 = vmatpush1.msra.mxu0 0.0
        %1013 = vmatprep.subr.mxu0 0.0
        %1014 = vmatpush1.msra.mxu0 0.0
        %1015 = vmatprep.subr.mxu0 0.0
        %1016 = vmatpush1.msra.mxu0 0.0
        %1017 = vmatprep.subr.mxu0 0.0
        %1018 = vmatpush1.msra.mxu0 0.0
        %1019 = vmatprep.subr.mxu0 0.0
        %1020 = vmatpush1.msra.mxu0 0.0
        %1021 = vmatprep.subr.mxu0 0.0
        %1022 = vmatpush1.msra.mxu0 0.0
        %1023 = vmatprep.subr.mxu0 0.0
        %1024 = vmatpush1.msra.mxu0 0.0
        %1025 = vmatprep.subr.mxu0 0.0
        %1026 = vmatpush1.msra.mxu0 0.0
        %1027 = vmatprep.subr.mxu0 0.0
        %1028 = vmatpush1.msra.mxu0 0.0
        %1029 = vmatprep.subr.mxu0 0.0
        %1030 = vmatpush1.msra.mxu0 0.0
        %1031 = vmatprep.subr.mxu0 0.0
        %1032 = vmatpush1.msra.mxu0 0.0
        %1033 = vmatprep.subr.mxu0 0.0
        %1034 = vmatpush1.msra.mxu0 0.0
        %1035 = vmatprep.subr.mxu0 0.0
        %1036 = vmatpush1.msra.mxu0 0.0
        %1037 = vmatprep.subr.mxu0 0.0
        %1038 = vmatpush1.msra.mxu0 0.0
        %1039 = vmatprep.subr.mxu0 0.0
        %1040 = vmatpush1.msra.mxu0 0.0
        %1041 = vmatprep.subr.mxu0 0.0
        %1042 = vmatpush1.msra.mxu0 0.0
        %1043 = vmatprep.subr.mxu0 0.0
        %1044 = vmatpush1.msra.mxu0 0.0
        %1045 = vmatprep.mubr.f32.mxu0 0.0
        %1046 = vmatmul.mubr.f32.gmra.mrb[0].mxu0 %v979
        %v1047 = vpop.f32.mrb[0].mxu0
        %v1048 = vadd.f32 0.0, %v1047
        %v1049 = vpop.f32.mrb[0].mxu0
        %1050 = vdwg.mxu0
        %v1051 = vsel %vm488, %v975, 0
        %1053 = vmatprep.subr.mxu0 0.0
        %1054 = vmatpush1.msra.mxu0 %v965
        %1055 = vmatprep.subr.mxu0 0.0
        %1056 = vmatpush1.msra.mxu0 %v966
        %1057 = vmatprep.subr.mxu0 0.0
        %1058 = vmatpush1.msra.mxu0 0.0
        %1059 = vmatprep.subr.mxu0 0.0
        %1060 = vmatpush1.msra.mxu0 0.0
        %1061 = vmatprep.subr.mxu0 0.0
        %1062 = vmatpush1.msra.mxu0 0.0
        %1063 = vmatprep.subr.mxu0 0.0
        %1064 = vmatpush1.msra.mxu0 0.0
        %1065 = vmatprep.subr.mxu0 0.0
        %1066 = vmatpush1.msra.mxu0 0.0
        %1067 = vmatprep.subr.mxu0 0.0
        %1068 = vmatpush1.msra.mxu0 0.0
        %1069 = vmatprep.subr.mxu0 0.0
        %1070 = vmatpush1.msra.mxu0 0.0
        %1071 = vmatprep.subr.mxu0 0.0
        %1072 = vmatpush1.msra.mxu0 0.0
        %1073 = vmatprep.subr.mxu0 0.0
        %1074 = vmatpush1.msra.mxu0 0.0
        %1075 = vmatprep.subr.mxu0 0.0
        %1076 = vmatpush1.msra.mxu0 0.0
        %1077 = vmatprep.subr.mxu0 0.0
        %1078 = vmatpush1.msra.mxu0 0.0
        %1079 = vmatprep.subr.mxu0 0.0
        %1080 = vmatpush1.msra.mxu0 0.0
        %1081 = vmatprep.subr.mxu0 0.0
        %1082 = vmatpush1.msra.mxu0 0.0
        %1083 = vmatprep.subr.mxu0 0.0
        %1084 = vmatpush1.msra.mxu0 0.0
        %1085 = vmatprep.subr.mxu0 0.0
        %1086 = vmatpush1.msra.mxu0 0.0
        %1087 = vmatprep.subr.mxu0 0.0
        %1088 = vmatpush1.msra.mxu0 0.0
        %1089 = vmatprep.subr.mxu0 0.0
        %1090 = vmatpush1.msra.mxu0 0.0
        %1091 = vmatprep.subr.mxu0 0.0
        %1092 = vmatpush1.msra.mxu0 0.0
        %1093 = vmatprep.subr.mxu0 0.0
        %1094 = vmatpush1.msra.mxu0 0.0
        %1095 = vmatprep.subr.mxu0 0.0
        %1096 = vmatpush1.msra.mxu0 0.0
        %1097 = vmatprep.subr.mxu0 0.0
        %1098 = vmatpush1.msra.mxu0 0.0
        %1099 = vmatprep.subr.mxu0 0.0
        %1100 = vmatpush1.msra.mxu0 0.0
        %1101 = vmatprep.subr.mxu0 0.0
        %1102 = vmatpush1.msra.mxu0 0.0
        %1103 = vmatprep.subr.mxu0 0.0
        %1104 = vmatpush1.msra.mxu0 0.0
        %1105 = vmatprep.subr.mxu0 0.0
        %1106 = vmatpush1.msra.mxu0 0.0
        %1107 = vmatprep.subr.mxu0 0.0
        %1108 = vmatpush1.msra.mxu0 0.0
        %1109 = vmatprep.subr.mxu0 0.0
        %1110 = vmatpush1.msra.mxu0 0.0
        %1111 = vmatprep.subr.mxu0 0.0
        %1112 = vmatpush1.msra.mxu0 0.0
        %1113 = vmatprep.subr.mxu0 0.0
        %1114 = vmatpush1.msra.mxu0 0.0
        %1115 = vmatprep.subr.mxu0 0.0
        %1116 = vmatpush1.msra.mxu0 0.0
        %1117 = vmatprep.mubr.f32.mxu0 0.0
        %1118 = vmatmul.mubr.f32.gmra.mrb[0].mxu0 %v1051
        %v1119 = vpop.f32.mrb[0].mxu0
        %v1120 = vadd.f32 %v1048, %v1119
        %v1121 = vpop.f32.mrb[0].mxu0
        %1122 = vdwg.mxu0
        %v1123 = vld [vmem:[%s7] sm:$0xff]
        %v1124 = vadd.f32 %v1120, %v1123
        %v1125 = vmax.f32 %v1124, 0.0
        %v1126 = vld [vmem:[%s8] sm:$0xff]
        %v1127 = vld [vmem:[%s8 + $0x8] sm:$0xff]
        %v1128 = vld [vmem:[%s8 + $0x10] sm:$0xff]
        %v1129 = vld [vmem:[%s8 + $0x18] sm:$0xff]
        %v1130 = vld [vmem:[%s9] sm:$0xff]
        %v1131 = vld [vmem:[%s9 + $0x8] sm:$0xff]
        %v1132 = vld [vmem:[%s9 + $0x10] sm:$0xff]
        %v1133 = vld [vmem:[%s9 + $0x18] sm:$0xff]
        %vm1134 = vcmask 64512
        %v1136 = vsel %vm1134, %v1126, 0
        %v1139 = vsel %vm1134, %v1127, 0
        %v1142 = vsel %vm1134, %v1128, 0
        %v1145 = vsel %vm1134, %v1129, 0
        %1147 = vmatprep.subr.mxu0 0.0
        %1148 = vmatpush1.msra.mxu0 %v1125
        %1149 = vmatprep.subr.mxu0 0.0
        %1150 = vmatpush1.msra.mxu0 0.0
        %1151 = vmatprep.subr.mxu0 0.0
        %1152 = vmatpush1.msra.mxu0 0.0
        %1153 = vmatprep.subr.mxu0 0.0
        %1154 = vmatpush1.msra.mxu0 0.0
        %1155 = vmatprep.subr.mxu0 0.0
        %1156 = vmatpush1.msra.mxu0 0.0
        %1157 = vmatprep.subr.mxu0 0.0
        %1158 = vmatpush1.msra.mxu0 0.0
        %1159 = vmatprep.subr.mxu0 0.0
        %1160 = vmatpush1.msra.mxu0 0.0
        %1161 = vmatprep.subr.mxu0 0.0
        %1162 = vmatpush1.msra.mxu0 0.0
        %1163 = vmatprep.subr.mxu0 0.0
        %1164 = vmatpush1.msra.mxu0 0.0
        %1165 = vmatprep.subr.mxu0 0.0
        %1166 = vmatpush1.msra.mxu0 0.0
        %1167 = vmatprep.subr.mxu0 0.0
        %1168 = vmatpush1.msra.mxu0 0.0
        %1169 = vmatprep.subr.mxu0 0.0
        %1170 = vmatpush1.msra.mxu0 0.0
        %1171 = vmatprep.subr.mxu0 0.0
        %1172 = vmatpush1.msra.mxu0 0.0
        %1173 = vmatprep.subr.mxu0 0.0
        %1174 = vmatpush1.msra.mxu0 0.0
        %1175 = vmatprep.subr.mxu0 0.0
        %1176 = vmatpush1.msra.mxu0 0.0
        %1177 = vmatprep.subr.mxu0 0.0
        %1178 = vmatpush1.msra.mxu0 0.0
        %1179 = vmatprep.subr.mxu0 0.0
        %1180 = vmatpush1.msra.mxu0 0.0
        %1181 = vmatprep.subr.mxu0 0.0
        %1182 = vmatpush1.msra.mxu0 0.0
        %1183 = vmatprep.subr.mxu0 0.0
        %1184 = vmatpush1.msra.mxu0 0.0
        %1185 = vmatprep.subr.mxu0 0.0
        %1186 = vmatpush1.msra.mxu0 0.0
        %1187 = vmatprep.subr.mxu0 0.0
        %1188 = vmatpush1.msra.mxu0 0.0
        %1189 = vmatprep.subr.mxu0 0.0
        %1190 = vmatpush1.msra.mxu0 0.0
        %1191 = vmatprep.subr.mxu0 0.0
        %1192 = vmatpush1.msra.mxu0 0.0
        %1193 = vmatprep.subr.mxu0 0.0
        %1194 = vmatpush1.msra.mxu0 0.0
        %1195 = vmatprep.subr.mxu0 0.0
        %1196 = vmatpush1.msra.mxu0 0.0
        %1197 = vmatprep.subr.mxu0 0.0
        %1198 = vmatpush1.msra.mxu0 0.0
        %1199 = vmatprep.subr.mxu0 0.0
        %1200 = vmatpush1.msra.mxu0 0.0
        %1201 = vmatprep.subr.mxu0 0.0
        %1202 = vmatpush1.msra.mxu0 0.0
        %1203 = vmatprep.subr.mxu0 0.0
        %1204 = vmatpush1.msra.mxu0 0.0
        %1205 = vmatprep.subr.mxu0 0.0
        %1206 = vmatpush1.msra.mxu0 0.0
        %1207 = vmatprep.subr.mxu0 0.0
        %1208 = vmatpush1.msra.mxu0 0.0
        %1209 = vmatprep.subr.mxu0 0.0
        %1210 = vmatpush1.msra.mxu0 0.0
        %1211 = vmatprep.mubr.f32.mxu0 0.0
        %1212 = vmatmul.mubr.f32.gmra.mrb[0].mxu0 %v1136
        %v1213 = vpop.f32.mrb[0].mxu0
        %v1214 = vadd.f32 %v1130, %v1213
        %v1215 = vpop.f32.mrb[0].mxu0
        %1216 = vmatprep.mubr.f32.mxu0 0.0
        %1217 = vmatmul.mubr.f32.gmra.mrb[0].mxu0 %v1139
        %v1218 = vpop.f32.mrb[0].mxu0
        %v1219 = vadd.f32 %v1131, %v1218
        %v1220 = vpop.f32.mrb[0].mxu0
        %1221 = vmatprep.mubr.f32.mxu0 0.0
        %1222 = vmatmul.mubr.f32.gmra.mrb[0].mxu0 %v1142
        %v1223 = vpop.f32.mrb[0].mxu0
        %v1224 = vadd.f32 %v1132, %v1223
        %v1225 = vpop.f32.mrb[0].mxu0
        %1226 = vmatprep.mubr.f32.mxu0 0.0
        %1227 = vmatmul.mubr.f32.gmra.mrb[0].mxu0 %v1145
        %v1228 = vpop.f32.mrb[0].mxu0
        %v1229 = vadd.f32 %v1133, %v1228
        %v1230 = vpop.f32.mrb[0].mxu0
        %1231 = vdwg.mxu0
        %v1232 = vadd.f32 %v1214, 3.0
        %v1233 = vadd.f32 %v1219, 3.0
        %v1234 = vadd.f32 %v1224, 3.0
        %v1235 = vadd.f32 %v1229, 3.0
        %v1236 = vmax.f32 %v1232, 0.0
        %v1237 = vmax.f32 %v1233, 0.0
        %v1238 = vmax.f32 %v1234, 0.0
        %v1239 = vmax.f32 %v1235, 0.0
        %v1240 = vmin.f32 %v1236, 6.0
        %v1241 = vmin.f32 %v1237, 6.0
        %v1242 = vmin.f32 %v1238, 6.0
        %v1243 = vmin.f32 %v1239, 6.0
        %v1244 = vmul.f32 %v1240, 0.16666667
        %v1245 = vmul.f32 %v1241, 0.16666667
        %v1246 = vmul.f32 %v1242, 0.16666667
        %v1247 = vmul.f32 %v1243, 0.16666667
        %1249 = vset.pattern.permute.xlu0 0
        %1250 = vperm.xlu0 %1249, %v1244
        %v1251 = vpop.permute.xlu0 %1250
        %1254 = vset.pattern.permute.xlu0 0
        %1255 = vperm.xlu0 %1254, %v1245
        %v1256 = vpop.permute.xlu0 %1255
        %v1258 = vmul.f32 %v572, %v1251
        %v1259 = vmul.f32 %v573, %v1251
        %v1260 = vmul.f32 %v574, %v1256
        %v1261 = vmul.f32 %v575, %v1256
        %1263 = vset.pattern.permute.xlu0 0
        %1264 = vperm.xlu0 %1263, %v1246
        %v1265 = vpop.permute.xlu0 %1264
        %1268 = vset.pattern.permute.xlu0 0
        %1269 = vperm.xlu0 %1268, %v1247
        %v1270 = vpop.permute.xlu0 %1269
        %v1272 = vmul.f32 %v954, %v1265
        %v1273 = vmul.f32 %v955, %v1265
        %v1274 = vmul.f32 %v956, %v1270
        %v1275 = vmul.f32 %v957, %v1270
        %v1276 = vld [vmem:[%s10] sm:$0xff]
        %1278 = vrot.lane.b32.xlu0 %v1276, 112
        %v1279 = vpop.permute.xlu0 %1278
        %v1280 = vsel %vm488, %v1279, 0
        %1282 = vmatprep.subr.mxu0 %v1273
        %1283 = vmatpush1.msra.mxu0 %v1272
        %1284 = vmatprep.subr.mxu0 %v1275
        %1285 = vmatpush1.msra.mxu0 %v1274
        %1286 = vmatprep.subr.mxu0 0.0
        %1287 = vmatpush1.msra.mxu0 0.0
        %1288 = vmatprep.subr.mxu0 0.0
        %1289 = vmatpush1.msra.mxu0 0.0
        %1290 = vmatprep.subr.mxu0 0.0
        %1291 = vmatpush1.msra.mxu0 0.0
        %1292 = vmatprep.subr.mxu0 0.0
        %1293 = vmatpush1.msra.mxu0 0.0
        %1294 = vmatprep.subr.mxu0 0.0
        %1295 = vmatpush1.msra.mxu0 0.0
        %1296 = vmatprep.subr.mxu0 0.0
        %1297 = vmatpush1.msra.mxu0 0.0
        %1298 = vmatprep.subr.mxu0 0.0
        %1299 = vmatpush1.msra.mxu0 0.0
        %1300 = vmatprep.subr.mxu0 0.0
        %1301 = vmatpush1.msra.mxu0 0.0
        %1302 = vmatprep.subr.mxu0 0.0
        %1303 = vmatpush1.msra.mxu0 0.0
        %1304 = vmatprep.subr.mxu0 0.0
        %1305 = vmatpush1.msra.mxu0 0.0
        %1306 = vmatprep.subr.mxu0 0.0
        %1307 = vmatpush1.msra.mxu0 0.0
        %1308 = vmatprep.subr.mxu0 0.0
        %1309 = vmatpush1.msra.mxu0 0.0
        %1310 = vmatprep.subr.mxu0 0.0
        %1311 = vmatpush1.msra.mxu0 0.0
        %1312 = vmatprep.subr.mxu0 0.0
        %1313 = vmatpush1.msra.mxu0 0.0
        %1314 = vmatprep.subr.mxu0 0.0
        %1315 = vmatpush1.msra.mxu0 0.0
        %1316 = vmatprep.subr.mxu0 0.0
        %1317 = vmatpush1.msra.mxu0 0.0
        %1318 = vmatprep.subr.mxu0 0.0
        %1319 = vmatpush1.msra.mxu0 0.0
        %1320 = vmatprep.subr.mxu0 0.0
        %1321 = vmatpush1.msra.mxu0 0.0
        %1322 = vmatprep.subr.mxu0 0.0
        %1323 = vmatpush1.msra.mxu0 0.0
        %1324 = vmatprep.subr.mxu0 0.0
        %1325 = vmatpush1.msra.mxu0 0.0
        %1326 = vmatprep.subr.mxu0 0.0
        %1327 = vmatpush1.msra.mxu0 0.0
        %1328 = vmatprep.subr.mxu0 0.0
        %1329 = vmatpush1.msra.mxu0 0.0
        %1330 = vmatprep.subr.mxu0 0.0
        %1331 = vmatpush1.msra.mxu0 0.0
        %1332 = vmatprep.subr.mxu0 0.0
        %1333 = vmatpush1.msra.mxu0 0.0
        %1334 = vmatprep.subr.mxu0 0.0
        %1335 = vmatpush1.msra.mxu0 0.0
        %1336 = vmatprep.subr.mxu0 0.0
        %1337 = vmatpush1.msra.mxu0 0.0
        %1338 = vmatprep.subr.mxu0 0.0
        %1339 = vmatpush1.msra.mxu0 0.0
        %1340 = vmatprep.subr.mxu0 0.0
        %1341 = vmatpush1.msra.mxu0 0.0
        %1342 = vmatprep.subr.mxu0 0.0
        %1343 = vmatpush1.msra.mxu0 0.0
        %1344 = vmatprep.subr.mxu0 0.0
        %1345 = vmatpush1.msra.mxu0 0.0
        %1346 = vmatprep.mubr.f32.mxu0 0.0
        %1347 = vmatmul.mubr.f32.gmra.mrb[0].mxu0 %v1280
        %v1348 = vpop.f32.mrb[0].mxu0
        %v1349 = vadd.f32 0.0, %v1348
        %v1350 = vpop.f32.mrb[0].mxu0
        %v1351 = vadd.f32 0.0, %v1350
        %1352 = vdwg.mxu0
        %v1353 = vsel %vm488, %v1276, 0
        %1355 = vmatprep.subr.mxu0 %v1259
        %1356 = vmatpush1.msra.mxu0 %v1258
        %1357 = vmatprep.subr.mxu0 %v1261
        %1358 = vmatpush1.msra.mxu0 %v1260
        %1359 = vmatprep.subr.mxu0 0.0
        %1360 = vmatpush1.msra.mxu0 0.0
        %1361 = vmatprep.subr.mxu0 0.0
        %1362 = vmatpush1.msra.mxu0 0.0
        %1363 = vmatprep.subr.mxu0 0.0
        %1364 = vmatpush1.msra.mxu0 0.0
        %1365 = vmatprep.subr.mxu0 0.0
        %1366 = vmatpush1.msra.mxu0 0.0
        %1367 = vmatprep.subr.mxu0 0.0
        %1368 = vmatpush1.msra.mxu0 0.0
        %1369 = vmatprep.subr.mxu0 0.0
        %1370 = vmatpush1.msra.mxu0 0.0
        %1371 = vmatprep.subr.mxu0 0.0
        %1372 = vmatpush1.msra.mxu0 0.0
        %1373 = vmatprep.subr.mxu0 0.0
        %1374 = vmatpush1.msra.mxu0 0.0
        %1375 = vmatprep.subr.mxu0 0.0
        %1376 = vmatpush1.msra.mxu0 0.0
        %1377 = vmatprep.subr.mxu0 0.0
        %1378 = vmatpush1.msra.mxu0 0.0
        %1379 = vmatprep.subr.mxu0 0.0
        %1380 = vmatpush1.msra.mxu0 0.0
        %1381 = vmatprep.subr.mxu0 0.0
        %1382 = vmatpush1.msra.mxu0 0.0
        %1383 = vmatprep.subr.mxu0 0.0
        %1384 = vmatpush1.msra.mxu0 0.0
        %1385 = vmatprep.subr.mxu0 0.0
        %1386 = vmatpush1.msra.mxu0 0.0
        %1387 = vmatprep.subr.mxu0 0.0
        %1388 = vmatpush1.msra.mxu0 0.0
        %1389 = vmatprep.subr.mxu0 0.0
        %1390 = vmatpush1.msra.mxu0 0.0
        %1391 = vmatprep.subr.mxu0 0.0
        %1392 = vmatpush1.msra.mxu0 0.0
        %1393 = vmatprep.subr.mxu0 0.0
        %1394 = vmatpush1.msra.mxu0 0.0
        %1395 = vmatprep.subr.mxu0 0.0
        %1396 = vmatpush1.msra.mxu0 0.0
        %1397 = vmatprep.subr.mxu0 0.0
        %1398 = vmatpush1.msra.mxu0 0.0
        %1399 = vmatprep.subr.mxu0 0.0
        %1400 = vmatpush1.msra.mxu0 0.0
        %1401 = vmatprep.subr.mxu0 0.0
        %1402 = vmatpush1.msra.mxu0 0.0
        %1403 = vmatprep.subr.mxu0 0.0
        %1404 = vmatpush1.msra.mxu0 0.0
        %1405 = vmatprep.subr.mxu0 0.0
        %1406 = vmatpush1.msra.mxu0 0.0
        %1407 = vmatprep.subr.mxu0 0.0
        %1408 = vmatpush1.msra.mxu0 0.0
        %1409 = vmatprep.subr.mxu0 0.0
        %1410 = vmatpush1.msra.mxu0 0.0
        %1411 = vmatprep.subr.mxu0 0.0
        %1412 = vmatpush1.msra.mxu0 0.0
        %1413 = vmatprep.subr.mxu0 0.0
        %1414 = vmatpush1.msra.mxu0 0.0
        %1415 = vmatprep.subr.mxu0 0.0
        %1416 = vmatpush1.msra.mxu0 0.0
        %1417 = vmatprep.subr.mxu0 0.0
        %1418 = vmatpush1.msra.mxu0 0.0
        %1419 = vmatprep.mubr.f32.mxu0 0.0
        %1420 = vmatmul.mubr.f32.gmra.mrb[0].mxu0 %v1353
        %v1421 = vpop.f32.mrb[0].mxu0
        %v1422 = vadd.f32 %v1349, %v1421
        %v1423 = vpop.f32.mrb[0].mxu0
        %v1424 = vadd.f32 %v1351, %v1423
        %1425 = vdwg.mxu0
        %v1426 = vld [vmem:[%s11] sm:$0xff]
        %1428 = vset.pattern.permute.xlu0 0
        %1429 = vperm.xlu0 %1428, %v1426
        %v1430 = vpop.permute.xlu0 %1429
        %v1432 = vadd.f32 %v1422, %v1430
        %v1433 = vadd.f32 %v1424, %v1430
        %v1434 = vld [vmem:[%s12] sm:$0xff]
        %1435 = vrot.lane.b32.xlu0 %v1432, 17
        %v1436 = vpop.permute.xlu0 %1435
        %1437 = vrot.lane.b32.xlu0 %v1433, 17
        %v1438 = vpop.permute.xlu0 %1437
        %v1439 = vsel %vm588, %v1436, %v1438
        %v1440 = vsel %vm588, %v1438, %v1436
        %v1441 = vmul.f32 %v1440, %v596
        %v1442 = vmul.f32 %v1439, %v600
        %1444 = vset.pattern.permute.xlu0 0
        %1445 = vperm.xlu0 %1444, %v1434
        %v1446 = vpop.permute.xlu0 %1445
        %v1448 = vmul.f32 %v1441, %v1446
        %v1449 = vmul.f32 %v1442, %v1446
        %v1450 = vadd.f32 %v1448, 0.0
        %v1451 = vadd.f32 %v1449, 0.0
        %1452 = vrot.lane.b32.xlu0 %v1432, 16
        %v1453 = vpop.permute.xlu0 %1452
        %1454 = vrot.lane.b32.xlu0 %v1433, 16
        %v1455 = vpop.permute.xlu0 %1454
        %v1456 = vsel %vm631, %v1453, %v1455
        %v1457 = vsel %vm631, %v1455, %v1453
        %v1458 = vmul.f32 %v1457, %v639
        %v1459 = vmul.f32 %v1456, %v643
        %1460 = vset.pattern.permute.xlu0 1
        %1461 = vperm.xlu0 %1460, %v1434
        %v1462 = vpop.permute.xlu0 %1461
        %v1464 = vmul.f32 %v1458, %v1462
        %v1465 = vmul.f32 %v1459, %v1462
        %v1466 = vadd.f32 %v1450, %v1464
        %v1467 = vadd.f32 %v1451, %v1465
        %1468 = vrot.lane.b32.xlu0 %v1432, 15
        %v1469 = vpop.permute.xlu0 %1468
        %1470 = vrot.lane.b32.xlu0 %v1433, 15
        %v1471 = vpop.permute.xlu0 %1470
        %v1472 = vsel %vm672, %v1469, %v1471
        %v1473 = vsel %vm672, %v1471, %v1469
        %v1474 = vmul.f32 %v1473, %v680
        %v1475 = vmul.f32 %v1472, %v684
        %1476 = vset.pattern.permute.xlu0 2
        %1477 = vperm.xlu0 %1476, %v1434
        %v1478 = vpop.permute.xlu0 %1477
        %v1480 = vmul.f32 %v1474, %v1478
        %v1481 = vmul.f32 %v1475, %v1478
        %v1482 = vadd.f32 %v1466, %v1480
        %v1483 = vadd.f32 %v1467, %v1481
        %1484 = vrot.lane.b32.xlu0 %v1432, 1
        %v1485 = vpop.permute.xlu0 %1484
        %1486 = vrot.lane.b32.xlu0 %v1433, 1
        %v1487 = vpop.permute.xlu0 %1486
        %v1488 = vsel %vm713, %v1485, %v1487
        %v1489 = vsel %vm713, %v1487, %v1485
        %v1490 = vmul.f32 %v1489, %v721
        %v1491 = vmul.f32 %v1488, %v725
        %1492 = vset.pattern.permute.xlu0 3
        %1493 = vperm.xlu0 %1492, %v1434
        %v1494 = vpop.permute.xlu0 %1493
        %v1496 = vmul.f32 %v1490, %v1494
        %v1497 = vmul.f32 %v1491, %v1494
        %v1498 = vadd.f32 %v1482, %v1496
        %v1499 = vadd.f32 %v1483, %v1497
        %v1500 = vmul.f32 %v1432, %v749
        %v1501 = vmul.f32 %v1433, %v753
        %1502 = vset.pattern.permute.xlu0 4
        %1503 = vperm.xlu0 %1502, %v1434
        %v1504 = vpop.permute.xlu0 %1503
        %v1506 = vmul.f32 %v1500, %v1504
        %v1507 = vmul.f32 %v1501, %v1504
        %v1508 = vadd.f32 %v1498, %v1506
        %v1509 = vadd.f32 %v1499, %v1507
        %1510 = vrot.lane.b32.xlu0 %v1432, 127
        %v1511 = vpop.permute.xlu0 %1510
        %1512 = vrot.lane.b32.xlu0 %v1433, 127
        %v1513 = vpop.permute.xlu0 %1512
        %v1514 = vsel %vm782, %v1511, %v1513
        %v1515 = vsel %vm782, %v1513, %v1511
        %v1516 = vmul.f32 %v1514, %v790
        %v1517 = vmul.f32 %v1515, %v794
        %1518 = vset.pattern.permute.xlu0 5
        %1519 = vperm.xlu0 %1518, %v1434
        %v1520 = vpop.permute.xlu0 %1519
        %v1522 = vmul.f32 %v1516, %v1520
        %v1523 = vmul.f32 %v1517, %v1520
        %v1524 = vadd.f32 %v1508, %v1522
        %v1525 = vadd.f32 %v1509, %v1523
        %1526 = vrot.lane.b32.xlu0 %v1432, 113
        %v1527 = vpop.permute.xlu0 %1526
        %1528 = vrot.lane.b32.xlu0 %v1433, 113
        %v1529 = vpop.permute.xlu0 %1528
        %v1530 = vsel %vm823, %v1527, %v1529
        %v1531 = vsel %vm823, %v1529, %v1527
        %v1532 = vmul.f32 %v1530, %v831
        %v1533 = vmul.f32 %v1531, %v835
        %1534 = vset.pattern.permute.xlu0 6
        %1535 = vperm.xlu0 %1534, %v1434
        %v1536 = vpop.permute.xlu0 %1535
        %v1538 = vmul.f32 %v1532, %v1536
        %v1539 = vmul.f32 %v1533, %v1536
        %v1540 = vadd.f32 %v1524, %v1538
        %v1541 = vadd.f32 %v1525, %v1539
        %1542 = vrot.lane.b32.xlu0 %v1432, 112
        %v1543 = vpop.permute.xlu0 %1542
        %1544 = vrot.lane.b32.xlu0 %v1433, 112
        %v1545 = vpop.permute.xlu0 %1544
        %v1546 = vsel %vm864, %v1543, %v1545
        %v1547 = vsel %vm864, %v1545, %v1543
        %v1548 = vmul.f32 %v1546, %v872
        %v1549 = vmul.f32 %v1547, %v876
        %1550 = vset.pattern.permute.xlu0 7
        %1551 = vperm.xlu0 %1550, %v1434
        %v1552 = vpop.permute.xlu0 %1551
        %v1554 = vmul.f32 %v1548, %v1552
        %v1555 = vmul.f32 %v1549, %v1552
        %v1556 = vadd.f32 %v1540, %v1554
        %v1557 = vadd.f32 %v1541, %v1555
        %1558 = vrot.lane.b32.xlu0 %v1432, 111
        %v1559 = vpop.permute.xlu0 %1558
        %1560 = vrot.lane.b32.xlu0 %v1433, 111
        %v1561 = vpop.permute.xlu0 %1560
        %v1562 = vsel %vm905, %v1559, %v1561
        %v1563 = vsel %vm905, %v1561, %v1559
        %v1564 = vmul.f32 %v1562, %v913
        %v1565 = vmul.f32 %v1563, %v917
        %1566 = vset.pattern.permute.xlu0 8
        %1567 = vperm.xlu0 %1566, %v1434
        %v1568 = vpop.permute.xlu0 %1567
        %v1570 = vmul.f32 %v1564, %v1568
        %v1571 = vmul.f32 %v1565, %v1568
        %v1572 = vadd.f32 %v1556, %v1570
        %v1573 = vadd.f32 %v1557, %v1571
        %v1574 = vld [vmem:[%s13] sm:$0xff]
        %1576 = vset.pattern.permute.xlu0 0
        %1577 = vperm.xlu0 %1576, %v1574
        %v1578 = vpop.permute.xlu0 %1577
        %v1580 = vadd.f32 %v1572, %v1578
        %v1581 = vadd.f32 %v1573, %v1578
        %v1582 = vadd.f32 %v1432, %v470
        %v1583 = vadd.f32 %v1433, %v471
        %1584 = vst [vmem:[%s460] sm:$0xff] %v1582
        %1585 = vst [vmem:[%s460 + $0x8] sm:$0xff] %v1583
        %v1586 = vadd.f32 %v1580, %v472
        %v1587 = vadd.f32 %v1581, %v473
        %1588 = vst [vmem:[%s460 + $0x10] sm:$0xff] %v1586
        %1589 = vst [vmem:[%s460 + $0x18] sm:$0xff] %v1587
        %s1590 = sand.u32 %s335, 1
        %s1591 = scalar_lea.sflag [#allocation3], %s1590
        %s1592 = sand.u32 %s335, 1
        %s1593 = smul.addr %s1592, 32
        %s1594 = scalar_lea.vmem [#allocation2], %s1593
        // Predicated region
        $region77: #{tpu_custom_call.1} parent=75 // pred_check
          %p1595 = pneg %p345
        $region78: #{tpu_custom_call.1} parent=75 // pred_check_branch
          %1597 = sbr.rel (%p1595) target = $region80
        $region79: #{tpu_custom_call.1} parent=75 // pred_region
          %s1599 = ssub.s32 512, 512
          %1600 = vsyncadd %s1591, %s1599
          %s1601 = smul.addr %s28, 4
          %s1602 = smul.addr %s1601, 128
          %s1603 = scalar_lea.hbm %s14, %s1602
          %s1604 = sshll.u32 %s1594, 4
          %s1605 = int_to_ptr.vmem [resolvable:$true] %s1604
          %1610 = dma.vmem_to_hbm [thread:$0]  %s1605, 512, %s1603, %s1591, 256, 256, 16
        $region80: #{tpu_custom_call.1} parent=75 // pred_fallthru
          _
      $region76: #{tpu_custom_call.1} parent=5 // pred_fallthru
        _
      %p1611 = scmp.le.s32.totalorder 2, %s23
      // Predicated region
      $region81: #{tpu_custom_call.1} parent=5 // pred_check
        %p1612 = pneg %p1611
      $region82: #{tpu_custom_call.1} parent=5 // pred_check_branch
        %1614 = sbr.rel (%p1612) target = $region84
      $region83: #{tpu_custom_call.1} parent=5 // pred_region
        %s1615 = ssub.s32 %s23, 2
        // Predicated region
        $region85: #{tpu_custom_call.1} parent=83 // pred_check
          %p1616 = pneg %p351
        $region86: #{tpu_custom_call.1} parent=83 // pred_check_branch
          %1618 = sbr.rel (%p1616) target = $region88
        $region87: #{tpu_custom_call.1} parent=83 // pred_region
          %s1619 = sand.u32 %s336, 1
          %s1620 = scalar_lea.sflag [#allocation3], %s1619
          %s1621 = sand.u32 %s336, 1
          %s1622 = smul.addr %s1621, 32
          %s1623 = scalar_lea.vmem [#allocation2], %s1622
          %1624 = dma.done %s1620, 512
        $region88: #{tpu_custom_call.1} parent=83 // pred_fallthru
          _
      $region84: #{tpu_custom_call.1} parent=5 // pred_fallthru
        _
    $region6: #{tpu_custom_call.1} parent=1 // loop_footer
      %s27 = sadd.s32 1, %s23
    $region7: #{tpu_custom_call.1} parent=1 // loop_footer_branch
      %22 = sbr.rel target = $region3
    $region8: #{tpu_custom_call.1} parent=1 // loop_exit
      _
    %1625 = vsyncpa [#allocation3], 1
    %s1626 = scalar_lea.sflag [#allocation3], 1
    %1627 = vsyncpa %s1626, 1

</llo_original>
